<compile_context>
chip_gen: v6e
topology: v6e:2x2x1
jax: 0.10.0
libtpu: 0.0.40
codegen_flags: <defaults>
</compile_context>

<pallas_src>
import jax
import jax.numpy as jnp
import numpy as np
from jax import lax
from jax.experimental import pallas as pl
from jax.experimental.pallas import tpu as pltpu

BF16 = jnp.bfloat16
F32 = jnp.float32


# ----------------------------- shared helpers --------------------------------
def _layernorm(x, gamma, beta, eps=1e-5):
    mu = jnp.mean(x, axis=-1, keepdims=True)
    var = jnp.mean((x - mu) ** 2, axis=-1, keepdims=True)
    return (x - mu) * lax.rsqrt(var + eps) * gamma + beta


def _head_block_diag(w_t, heads):
    """(D, D) -> (E, E) block-diagonal copy of w_t on each head block."""
    d = w_t.shape[0]
    e = d * heads
    m = jnp.zeros((e, e), w_t.dtype)
    for h in range(heads):
        m = m.at[h * d:(h + 1) * d, h * d:(h + 1) * d].set(w_t)
    return m


# ----------------------------- Pallas kernel ---------------------------------
def make_transformer_block_kernel(num_heads, embed_size, batch_block, seq_len):
    H, E, B, S = num_heads, embed_size, batch_block, seq_len
    D = E // H

    def kernel(x_ref, bias_ref, wqkv_ref, fco_w_ref, ff1_w_ref, ff2_w_ref,
               pslab_ref, ff1_b_ref, out_ref, head_acc):
        x_bf = x_ref[...]                           # (B*S, E) bf16 activations

        # --- QKV: single (rows,E)@(E,E) matmul per projection.  Weights are
        # block-diagonal (head-shared Linear replicated on the diagonal), so
        # the result is already in head-interleaved (concat) lane layout.
        # 1/sqrt(E) is folded into wqkv[0] host-side.
        q = jnp.dot(x_bf, wqkv_ref[0], preferred_element_type=F32).astype(BF16)
        k = jnp.dot(x_bf, wqkv_ref[1], preferred_element_type=F32).astype(BF16)
        v = jnp.dot(x_bf, wqkv_ref[2], preferred_element_type=F32).astype(BF16)

        # --- per-(batch, head) attention.  Head outputs are written into a
        # VMEM scratch slab at static row/lane offsets (no SSA concat chain).
        for b in range(B):
            bias_b = bias_ref[b]                    # (1, S) additive key mask
            rs = slice(b * S, (b + 1) * S)
            for h in range(H):
                cs = slice(h * D, (h + 1) * D)
                qh, kh, vh = q[rs, cs], k[rs, cs], v[rs, cs]
                energy = lax.dot_general(qh, kh, (((1,), (1,)), ((), ())),
                                         preferred_element_type=F32)   # (S,S)
                energy = energy + bias_b
                e_max = jnp.max(energy, axis=-1, keepdims=True)
                p = jnp.exp(energy - e_max)                            # f32 stats
                denom = jnp.sum(p, axis=-1, keepdims=True)
                attn = (p * pl.reciprocal(denom, approx=True)).astype(BF16)
                head_acc[rs, cs] = jnp.dot(attn, vh,
                                           preferred_element_type=F32)  # (S,D)

        concat = head_acc[...]                      # (B*S, E) f32

        pslab = pslab_ref[...]                      # (6, E) packed small params
        fco_b, ln1_g, ln1_b = pslab[0:1], pslab[1:2], pslab[2:3]
        ff2_b, ln2_g, ln2_b = pslab[3:4], pslab[4:5], pslab[5:6]

        attn_out = jnp.dot(concat.astype(BF16), fco_w_ref[...],
                           preferred_element_type=F32) + fco_b
        x1 = _layernorm(attn_out + x_bf.astype(F32), ln1_g, ln1_b)
        hdn = jnp.maximum(jnp.dot(x1.astype(BF16), ff1_w_ref[...],
                                  preferred_element_type=F32) + ff1_b_ref[...],
                          0.0)
        ff = jnp.dot(hdn.astype(BF16), ff2_w_ref[...],
                     preferred_element_type=F32) + ff2_b
        out_ref[...] = _layernorm(ff + x1, ln2_g, ln2_b).astype(out_ref.dtype)

    return kernel


def transformer_block_pallas(x_rows, bias_n1s, layer_params, heads, seq_len,
                             batch_block):
    """x_rows: (N*S, E) bf16; bias_n1s: (N, 1, S) f32 additive key mask."""
    R, E = x_rows.shape
    S, B = seq_len, batch_block
    N = R // S
    p = layer_params
    F = p["ff1_w_t"].shape[1]
    kernel = make_transformer_block_kernel(heads, E, B, S)

    weights = [p["wqkv_blk"], p["fco_w_t"], p["ff1_w_t"], p["ff2_w_t"],
               p["pslab"], p["ff1_b"]]

    def const_spec(arr):
        nd = arr.ndim
        return pl.BlockSpec(arr.shape, lambda n, _nd=nd: (0,) * _nd)

    rows_blk = B * S
    in_specs = ([pl.BlockSpec((rows_blk, E), lambda n: (n, 0)),
                 pl.BlockSpec((B, 1, S), lambda n: (n, 0, 0))]
                + [const_spec(w) for w in weights])

    # advisory cost hint for XLA scheduling around the embedding-gather glue
    flops = int(2 * R * E * E * 4                       # q, k, v, fc_out
                + 2 * (2 * N * heads * S * S * (E // heads))  # energy + attn@V
                + 2 * R * E * F * 2                     # ff1 + ff2
                + 12 * R * E)                           # elementwise (rough)
    trans = int(N * heads * S * S + N * heads * S + 2 * R)
    bytes_acc = int(x_rows.size * 2 * 2 + bias_n1s.size * 4
                    + sum(int(w.size) * w.dtype.itemsize for w in weights))

    return pl.pallas_call(
        kernel,
        out_shape=jax.ShapeDtypeStruct((R, E), BF16),
        grid=(N // B,),
        in_specs=in_specs,
        out_specs=pl.BlockSpec((rows_blk, E), lambda n: (n, 0)),
        scratch_shapes=[pltpu.VMEM((rows_blk, E), F32)],
        compiler_params=pltpu.CompilerParams(
            dimension_semantics=("parallel",)),
        cost_estimate=pl.CostEstimate(flops=flops, transcendentals=trans,
                                      bytes_accessed=bytes_acc),
    )(x_rows, bias_n1s, *weights)


# ------------------------------ Encoder (Pallas) ------------------------------
def encoder_forward_pallas(tokens, mask_ns, params):
    """tokens: (N, S) int32; mask_ns: (N, S) int32 (1 = valid)."""
    N, S = tokens.shape
    E = params["embed_size"]
    # glue: embedding gathers + add; dropout identity in eval
    word = jnp.take(params["word_emb"], tokens, axis=0)          # (N, S, E) f32
    pos = jnp.take(params["pos_emb"], jnp.arange(S), axis=0)     # (S, E)
    out = (word + pos[None, :, :]).astype(BF16).reshape(N * S, E)
    # additive key mask, computed once outside the kernels
    bias_n1s = jnp.where(mask_ns == 0, -1e20, 0.0).astype(F32).reshape(N, 1, S)

    # batch as many sequences per grid step as fit a ~128-row MXU pass
    B = max(1, min(N, max(1, 128 // S)))
    while N % B:
        B -= 1
    # TODO(synk): at these tiny shapes B == N so the grid collapses to 1; once
    # N grows keep N // B >= 2 so both v7x TensorCores get work.

    for layer in params["layers"]:
        out = transformer_block_pallas(out, bias_n1s, layer, params["heads"],
                                       S, B)
    return out.reshape(N, S, E).astype(F32)


# ------------------------------ Pure-JAX reference ----------------------------
def encoder_forward_ref(tokens, mask_ns, params):
    """Mirrors the PyTorch forward; matmuls use bf16 operands / f32 accum so
    the comparison validates structure, not dtype."""
    N, S = tokens.shape
    E = params["embed_size"]
    H = params["heads"]
    D = E // H
    word = jnp.take(params["word_emb"], tokens, axis=0)
    pos = jnp.take(params["pos_emb"], jnp.arange(S), axis=0)
    out = word + pos[None, :, :]
    mask4 = mask_ns.reshape(N, 1, 1, S)

    def ein(eq, a, b):
        return jnp.einsum(eq, a.astype(BF16), b.astype(BF16),
                          preferred_element_type=F32)

    for p in params["layers"]:
        x = out
        xh = x.reshape(N, S, H, D)
        v = ein('nshd,od->nsho', xh, p["Wv"])
        k = ein('nshd,od->nsho', xh, p["Wk"])
        q = ein('nshd,od->nsho', xh, p["Wq"])
        energy = ein('nqhd,nkhd->nhqk', q, k)
        energy = jnp.where(mask4 == 0, -1e20, energy)
        attn = jax.nn.softmax(energy / (E ** 0.5), axis=3)
        o = ein('nhql,nlhd->nqhd', attn, v).reshape(N, S, E)
        o = ein('nse,oe->nso', o, p["Wfc"]) + p["bfc"]
        x1 = _layernorm(o + x, p["g1"], p["be1"])
        hdn = jax.nn.relu(ein('nse,oe->nso', x1, p["W1"]) + p["b1"])
        ff = ein('nsf,of->nso', hdn, p["W2"]) + p["b2"]
        out = _layernorm(ff + x1, p["g2"], p["be2"])
    return out


# ------------------------------ parameter init --------------------------------
def init_params(key, src_vocab_size, embed_size, num_layers, heads,
                forward_expansion, max_length):
    D = embed_size // heads
    F = forward_expansion * embed_size
    scale = 1.0 / (embed_size ** 0.5)
    keys = jax.random.split(key, 2 + num_layers * 8)
    it = iter(keys)
    nrm = lambda k, shp, s=0.1: (jax.random.normal(k, shp, jnp.float32) * s)

    params = {
        "embed_size": embed_size,
        "heads": heads,
        "word_emb": nrm(next(it), (src_vocab_size, embed_size)),
        "pos_emb": nrm(next(it), (max_length, embed_size)),
        "layers": [],
    }

    for _ in range(num_layers):
        Wv = nrm(next(it), (D, D))
        Wk = nrm(next(it), (D, D))
        Wq = nrm(next(it), (D, D))
        Wfc = nrm(next(it), (embed_size, embed_size))
        bfc = nrm(next(it), (embed_size,))
        W1 = nrm(next(it), (F, embed_size))
        b1 = nrm(next(it), (F,))
        W2 = nrm(next(it), (embed_size, F))
        b2 = jnp.zeros((embed_size,), jnp.float32)
        g1 = jnp.ones((embed_size,), jnp.float32)
        be1 = jnp.zeros((embed_size,), jnp.float32)
        g2 = jnp.ones((embed_size,), jnp.float32)
        be2 = jnp.zeros((embed_size,), jnp.float32)

        # kernel-ready forms: block-diagonal QKV weights (softmax scale folded
        # into Q) stacked into one (3, E, E) bf16 slab; transposed fc/ffn
        # weights in bf16; small (E,) params packed into one (6, E) f32 slab.
        wqkv_blk = jnp.stack([_head_block_diag(Wq.T * scale, heads),
                              _head_block_diag(Wk.T, heads),
                              _head_block_diag(Wv.T, heads)]).astype(BF16)
        pslab = jnp.stack([bfc, g1, be1, b2, g2, be2], axis=0)  # (6, E) f32

        layer = {
            # torch-convention weights (for the reference)
            "Wv": Wv, "Wk": Wk, "Wq": Wq, "Wfc": Wfc, "bfc": bfc,
            "W1": W1, "b1": b1, "W2": W2, "b2": b2,
            "g1": g1, "be1": be1, "g2": g2, "be2": be2,
            # kernel-ready forms
            "wqkv_blk": wqkv_blk,
            "fco_w_t": Wfc.T.astype(BF16),
            "ff1_w_t": W1.T.astype(BF16),
            "ff2_w_t": W2.T.astype(BF16),
            "pslab": pslab,
            "ff1_b": b1.reshape(1, F),
        }
        params["layers"].append(layer)
    return params


# ----------------------------------- main -------------------------------------
if __name__ == "__main__":
    # small shapes implied by the forward pass
    N, S = 2, 8
    src_vocab_size, embed_size, num_layers, heads = 50, 32, 2, 4
    forward_expansion, max_length = 2, 16

    key = jax.random.PRNGKey(0)
    kp, kt = jax.random.split(key)
    params = init_params(kp, src_vocab_size, embed_size, num_layers, heads,
                         forward_expansion, max_length)

    tokens = jax.random.randint(kt, (N, S), 0, src_vocab_size, dtype=jnp.int32)
    # key-padding mask: sequence lengths 8 and 5
    lengths = jnp.array([8, 5], dtype=jnp.int32)
    mask_ns = (jnp.arange(S)[None, :] < lengths[:, None]).astype(jnp.int32)

    out = encoder_forward_pallas(tokens, mask_ns, params)
    out = jax.block_until_ready(out)

    ref = jax.block_until_ready(encoder_forward_ref(tokens, mask_ns, params))
    # tolerance accounts for bf16-operand matmuls, bf16 inter-layer activations,
    # approx reciprocal and kernel-side scale folding (all blessed perf
    # choices); structural bugs would blow well past this.
    np.testing.assert_allclose(np.asarray(out), np.asarray(ref),
                               rtol=3e-2, atol=3e-2)
    print("KERNEL_OK")
</pallas_src>

<mosaic_0001>
module attributes {stable_mosaic.version = 11 : i64} {
  func.func @kernel(%arg0: i32, %arg1: memref<16x32xbf16, #tpu.memory_space<vmem>>, %arg2: memref<2x1x8xf32, #tpu.memory_space<vmem>>, %arg3: memref<3x32x32xbf16, #tpu.memory_space<vmem>>, %arg4: memref<32x32xbf16, #tpu.memory_space<vmem>>, %arg5: memref<32x64xbf16, #tpu.memory_space<vmem>>, %arg6: memref<64x32xbf16, #tpu.memory_space<vmem>>, %arg7: memref<6x32xf32, #tpu.memory_space<vmem>>, %arg8: memref<1x64xf32, #tpu.memory_space<vmem>>, %arg9: memref<16x32xbf16, #tpu.memory_space<vmem>>, %arg10: memref<16x32xf32, #tpu.memory_space<vmem>>) attributes {dimension_semantics = [#tpu.dimension_semantics<parallel>], iteration_bounds = array<i64: 1>, scalar_prefetch = 0 : i64, scratch_operands = 1 : i64, tpu.core_type = #tpu.core_type<tc>, window_params = [{transform_indices = @transform_0, window_bounds = array<i64: 16, 32>}, {transform_indices = @transform_1, window_bounds = array<i64: 2, 1, 8>}, {pipeline_mode = #tpu.pipeline_mode<synchronous>, transform_indices = @transform_2, window_bounds = array<i64: 3, 32, 32>}, {pipeline_mode = #tpu.pipeline_mode<synchronous>, transform_indices = @transform_3, window_bounds = array<i64: 32, 32>}, {pipeline_mode = #tpu.pipeline_mode<synchronous>, transform_indices = @transform_4, window_bounds = array<i64: 32, 64>}, {pipeline_mode = #tpu.pipeline_mode<synchronous>, transform_indices = @transform_5, window_bounds = array<i64: 64, 32>}, {pipeline_mode = #tpu.pipeline_mode<synchronous>, transform_indices = @transform_6, window_bounds = array<i64: 6, 32>}, {pipeline_mode = #tpu.pipeline_mode<synchronous>, transform_indices = @transform_7, window_bounds = array<i64: 1, 64>}, {transform_indices = @transform_8, window_bounds = array<i64: 16, 32>}]} {
    %c0 = arith.constant 0 : index
    %c0_0 = arith.constant 0 : index
    %0 = vector.load %arg1[%c0, %c0_0] : memref<16x32xbf16, #tpu.memory_space<vmem>>, vector<16x32xbf16>
    %c0_1 = arith.constant 0 : index
    %c0_2 = arith.constant 0 : index
    %c0_3 = arith.constant 0 : index
    %1 = vector.load %arg3[%c0_1, %c0_2, %c0_3] : memref<3x32x32xbf16, #tpu.memory_space<vmem>>, vector<1x32x32xbf16>
    %2 = vector.shape_cast %1 : vector<1x32x32xbf16> to vector<32x32xbf16>
    %cst = arith.constant dense<0.000000e+00> : vector<16x32xf32>
    %3 = tpu.matmul %0, %2, %cst {dimension_numbers = #tpu.dot_dimension_numbers<[1], [0], [0], [1], [0, 0, 1, 1], [], []>} : vector<16x32xbf16>, vector<32x32xbf16>, vector<16x32xf32> -> vector<16x32xf32>
    %4 = arith.truncf %3 : vector<16x32xf32> to vector<16x32xbf16>
    %c1 = arith.constant 1 : index
    %c0_4 = arith.constant 0 : index
    %c0_5 = arith.constant 0 : index
    %5 = vector.load %arg3[%c1, %c0_4, %c0_5] : memref<3x32x32xbf16, #tpu.memory_space<vmem>>, vector<1x32x32xbf16>
    %6 = vector.shape_cast %5 : vector<1x32x32xbf16> to vector<32x32xbf16>
    %cst_6 = arith.constant dense<0.000000e+00> : vector<16x32xf32>
    %7 = tpu.matmul %0, %6, %cst_6 {dimension_numbers = #tpu.dot_dimension_numbers<[1], [0], [0], [1], [0, 0, 1, 1], [], []>} : vector<16x32xbf16>, vector<32x32xbf16>, vector<16x32xf32> -> vector<16x32xf32>
    %8 = arith.truncf %7 : vector<16x32xf32> to vector<16x32xbf16>
    %c2 = arith.constant 2 : index
    %c0_7 = arith.constant 0 : index
    %c0_8 = arith.constant 0 : index
    %9 = vector.load %arg3[%c2, %c0_7, %c0_8] : memref<3x32x32xbf16, #tpu.memory_space<vmem>>, vector<1x32x32xbf16>
    %10 = vector.shape_cast %9 : vector<1x32x32xbf16> to vector<32x32xbf16>
    %cst_9 = arith.constant dense<0.000000e+00> : vector<16x32xf32>
    %11 = tpu.matmul %0, %10, %cst_9 {dimension_numbers = #tpu.dot_dimension_numbers<[1], [0], [0], [1], [0, 0, 1, 1], [], []>} : vector<16x32xbf16>, vector<32x32xbf16>, vector<16x32xf32> -> vector<16x32xf32>
    %12 = arith.truncf %11 : vector<16x32xf32> to vector<16x32xbf16>
    %c0_10 = arith.constant 0 : index
    %c0_11 = arith.constant 0 : index
    %c0_12 = arith.constant 0 : index
    %13 = vector.load %arg2[%c0_10, %c0_11, %c0_12] : memref<2x1x8xf32, #tpu.memory_space<vmem>>, vector<1x1x8xf32>
    %14 = vector.shape_cast %13 : vector<1x1x8xf32> to vector<1x8xf32>
    %15 = vector.extract_strided_slice %4 {offsets = [0, 0], sizes = [8, 8], strides = [1, 1]} : vector<16x32xbf16> to vector<8x8xbf16>
    %16 = vector.extract_strided_slice %8 {offsets = [0, 0], sizes = [8, 8], strides = [1, 1]} : vector<16x32xbf16> to vector<8x8xbf16>
    %17 = vector.extract_strided_slice %12 {offsets = [0, 0], sizes = [8, 8], strides = [1, 1]} : vector<16x32xbf16> to vector<8x8xbf16>
    %cst_13 = arith.constant dense<0.000000e+00> : vector<8x8xf32>
    %18 = tpu.matmul %15, %16, %cst_13 {dimension_numbers = #tpu.dot_dimension_numbers<[1], [1], [0], [0], [0, 0, 1, 0], [], []>} : vector<8x8xbf16>, vector<8x8xbf16>, vector<8x8xf32> -> vector<8x8xf32>
    %19 = vector.broadcast %14 : vector<1x8xf32> to vector<8x8xf32>
    %20 = arith.addf %18, %19 : vector<8x8xf32>
    %cst_14 = arith.constant dense<0xFF800000> : vector<8xf32>
    %21 = vector.multi_reduction <maximumf>, %20, %cst_14 [1] : vector<8x8xf32> to vector<8xf32>
    %22 = vector.shape_cast %21 : vector<8xf32> to vector<8x1xf32>
    %23 = vector.broadcast %22 : vector<8x1xf32> to vector<8x8xf32>
    %24 = arith.subf %20, %23 : vector<8x8xf32>
    %25 = math.exp %24 : vector<8x8xf32>
    %cst_15 = arith.constant dense<0.000000e+00> : vector<8xf32>
    %26 = vector.multi_reduction <add>, %25, %cst_15 [1] : vector<8x8xf32> to vector<8xf32>
    %27 = vector.shape_cast %26 : vector<8xf32> to vector<8x1xf32>
    %28 = tpu.reciprocal %27 {approx = true} : vector<8x1xf32> -> vector<8x1xf32>
    %29 = vector.broadcast %28 : vector<8x1xf32> to vector<8x8xf32>
    %30 = arith.mulf %25, %29 : vector<8x8xf32>
    %31 = arith.truncf %30 : vector<8x8xf32> to vector<8x8xbf16>
    %cst_16 = arith.constant dense<0.000000e+00> : vector<8x8xf32>
    %32 = tpu.matmul %31, %17, %cst_16 {dimension_numbers = #tpu.dot_dimension_numbers<[1], [0], [0], [1], [0, 0, 1, 1], [], []>} : vector<8x8xbf16>, vector<8x8xbf16>, vector<8x8xf32> -> vector<8x8xf32>
    %c0_17 = arith.constant 0 : index
    %c0_18 = arith.constant 0 : index
    %33 = vector.load %arg10[%c0_17, %c0_18] : memref<16x32xf32, #tpu.memory_space<vmem>>, vector<8x8xf32>
    tpu.vector_store %arg10[%c0_17, %c0_18], %32 {strides = array<i32>} : memref<16x32xf32, #tpu.memory_space<vmem>>, vector<8x8xf32>,
    %34 = vector.extract_strided_slice %4 {offsets = [0, 8], sizes = [8, 8], strides = [1, 1]} : vector<16x32xbf16> to vector<8x8xbf16>
    %35 = vector.extract_strided_slice %8 {offsets = [0, 8], sizes = [8, 8], strides = [1, 1]} : vector<16x32xbf16> to vector<8x8xbf16>
    %36 = vector.extract_strided_slice %12 {offsets = [0, 8], sizes = [8, 8], strides = [1, 1]} : vector<16x32xbf16> to vector<8x8xbf16>
    %cst_19 = arith.constant dense<0.000000e+00> : vector<8x8xf32>
    %37 = tpu.matmul %34, %35, %cst_19 {dimension_numbers = #tpu.dot_dimension_numbers<[1], [1], [0], [0], [0, 0, 1, 0], [], []>} : vector<8x8xbf16>, vector<8x8xbf16>, vector<8x8xf32> -> vector<8x8xf32>
    %38 = vector.broadcast %14 : vector<1x8xf32> to vector<8x8xf32>
    %39 = arith.addf %37, %38 : vector<8x8xf32>
    %cst_20 = arith.constant dense<0xFF800000> : vector<8xf32>
    %40 = vector.multi_reduction <maximumf>, %39, %cst_20 [1] : vector<8x8xf32> to vector<8xf32>
    %41 = vector.shape_cast %40 : vector<8xf32> to vector<8x1xf32>
    %42 = vector.broadcast %41 : vector<8x1xf32> to vector<8x8xf32>
    %43 = arith.subf %39, %42 : vector<8x8xf32>
    %44 = math.exp %43 : vector<8x8xf32>
    %cst_21 = arith.constant dense<0.000000e+00> : vector<8xf32>
    %45 = vector.multi_reduction <add>, %44, %cst_21 [1] : vector<8x8xf32> to vector<8xf32>
    %46 = vector.shape_cast %45 : vector<8xf32> to vector<8x1xf32>
    %47 = tpu.reciprocal %46 {approx = true} : vector<8x1xf32> -> vector<8x1xf32>
    %48 = vector.broadcast %47 : vector<8x1xf32> to vector<8x8xf32>
    %49 = arith.mulf %44, %48 : vector<8x8xf32>
    %50 = arith.truncf %49 : vector<8x8xf32> to vector<8x8xbf16>
    %cst_22 = arith.constant dense<0.000000e+00> : vector<8x8xf32>
    %51 = tpu.matmul %50, %36, %cst_22 {dimension_numbers = #tpu.dot_dimension_numbers<[1], [0], [0], [1], [0, 0, 1, 1], [], []>} : vector<8x8xbf16>, vector<8x8xbf16>, vector<8x8xf32> -> vector<8x8xf32>
    %c0_23 = arith.constant 0 : index
    %c8 = arith.constant 8 : index
    %52 = vector.load %arg10[%c0_23, %c8] : memref<16x32xf32, #tpu.memory_space<vmem>>, vector<8x8xf32>
    tpu.vector_store %arg10[%c0_23, %c8], %51 {strides = array<i32>} : memref<16x32xf32, #tpu.memory_space<vmem>>, vector<8x8xf32>,
    %53 = vector.extract_strided_slice %4 {offsets = [0, 16], sizes = [8, 8], strides = [1, 1]} : vector<16x32xbf16> to vector<8x8xbf16>
    %54 = vector.extract_strided_slice %8 {offsets = [0, 16], sizes = [8, 8], strides = [1, 1]} : vector<16x32xbf16> to vector<8x8xbf16>
    %55 = vector.extract_strided_slice %12 {offsets = [0, 16], sizes = [8, 8], strides = [1, 1]} : vector<16x32xbf16> to vector<8x8xbf16>
    %cst_24 = arith.constant dense<0.000000e+00> : vector<8x8xf32>
    %56 = tpu.matmul %53, %54, %cst_24 {dimension_numbers = #tpu.dot_dimension_numbers<[1], [1], [0], [0], [0, 0, 1, 0], [], []>} : vector<8x8xbf16>, vector<8x8xbf16>, vector<8x8xf32> -> vector<8x8xf32>
    %57 = vector.broadcast %14 : vector<1x8xf32> to vector<8x8xf32>
    %58 = arith.addf %56, %57 : vector<8x8xf32>
    %cst_25 = arith.constant dense<0xFF800000> : vector<8xf32>
    %59 = vector.multi_reduction <maximumf>, %58, %cst_25 [1] : vector<8x8xf32> to vector<8xf32>
    %60 = vector.shape_cast %59 : vector<8xf32> to vector<8x1xf32>
    %61 = vector.broadcast %60 : vector<8x1xf32> to vector<8x8xf32>
    %62 = arith.subf %58, %61 : vector<8x8xf32>
    %63 = math.exp %62 : vector<8x8xf32>
    %cst_26 = arith.constant dense<0.000000e+00> : vector<8xf32>
    %64 = vector.multi_reduction <add>, %63, %cst_26 [1] : vector<8x8xf32> to vector<8xf32>
    %65 = vector.shape_cast %64 : vector<8xf32> to vector<8x1xf32>
    %66 = tpu.reciprocal %65 {approx = true} : vector<8x1xf32> -> vector<8x1xf32>
    %67 = vector.broadcast %66 : vector<8x1xf32> to vector<8x8xf32>
    %68 = arith.mulf %63, %67 : vector<8x8xf32>
    %69 = arith.truncf %68 : vector<8x8xf32> to vector<8x8xbf16>
    %cst_27 = arith.constant dense<0.000000e+00> : vector<8x8xf32>
    %70 = tpu.matmul %69, %55, %cst_27 {dimension_numbers = #tpu.dot_dimension_numbers<[1], [0], [0], [1], [0, 0, 1, 1], [], []>} : vector<8x8xbf16>, vector<8x8xbf16>, vector<8x8xf32> -> vector<8x8xf32>
    %c0_28 = arith.constant 0 : index
    %c16 = arith.constant 16 : index
    %71 = vector.load %arg10[%c0_28, %c16] : memref<16x32xf32, #tpu.memory_space<vmem>>, vector<8x8xf32>
    tpu.vector_store %arg10[%c0_28, %c16], %70 {strides = array<i32>} : memref<16x32xf32, #tpu.memory_space<vmem>>, vector<8x8xf32>,
    %72 = vector.extract_strided_slice %4 {offsets = [0, 24], sizes = [8, 8], strides = [1, 1]} : vector<16x32xbf16> to vector<8x8xbf16>
    %73 = vector.extract_strided_slice %8 {offsets = [0, 24], sizes = [8, 8], strides = [1, 1]} : vector<16x32xbf16> to vector<8x8xbf16>
    %74 = vector.extract_strided_slice %12 {offsets = [0, 24], sizes = [8, 8], strides = [1, 1]} : vector<16x32xbf16> to vector<8x8xbf16>
    %cst_29 = arith.constant dense<0.000000e+00> : vector<8x8xf32>
    %75 = tpu.matmul %72, %73, %cst_29 {dimension_numbers = #tpu.dot_dimension_numbers<[1], [1], [0], [0], [0, 0, 1, 0], [], []>} : vector<8x8xbf16>, vector<8x8xbf16>, vector<8x8xf32> -> vector<8x8xf32>
    %76 = vector.broadcast %14 : vector<1x8xf32> to vector<8x8xf32>
    %77 = arith.addf %75, %76 : vector<8x8xf32>
    %cst_30 = arith.constant dense<0xFF800000> : vector<8xf32>
    %78 = vector.multi_reduction <maximumf>, %77, %cst_30 [1] : vector<8x8xf32> to vector<8xf32>
    %79 = vector.shape_cast %78 : vector<8xf32> to vector<8x1xf32>
    %80 = vector.broadcast %79 : vector<8x1xf32> to vector<8x8xf32>
    %81 = arith.subf %77, %80 : vector<8x8xf32>
    %82 = math.exp %81 : vector<8x8xf32>
    %cst_31 = arith.constant dense<0.000000e+00> : vector<8xf32>
    %83 = vector.multi_reduction <add>, %82, %cst_31 [1] : vector<8x8xf32> to vector<8xf32>
    %84 = vector.shape_cast %83 : vector<8xf32> to vector<8x1xf32>
    %85 = tpu.reciprocal %84 {approx = true} : vector<8x1xf32> -> vector<8x1xf32>
    %86 = vector.broadcast %85 : vector<8x1xf32> to vector<8x8xf32>
    %87 = arith.mulf %82, %86 : vector<8x8xf32>
    %88 = arith.truncf %87 : vector<8x8xf32> to vector<8x8xbf16>
    %cst_32 = arith.constant dense<0.000000e+00> : vector<8x8xf32>
    %89 = tpu.matmul %88, %74, %cst_32 {dimension_numbers = #tpu.dot_dimension_numbers<[1], [0], [0], [1], [0, 0, 1, 1], [], []>} : vector<8x8xbf16>, vector<8x8xbf16>, vector<8x8xf32> -> vector<8x8xf32>
    %c0_33 = arith.constant 0 : index
    %c24 = arith.constant 24 : index
    %90 = vector.load %arg10[%c0_33, %c24] : memref<16x32xf32, #tpu.memory_space<vmem>>, vector<8x8xf32>
    tpu.vector_store %arg10[%c0_33, %c24], %89 {strides = array<i32>} : memref<16x32xf32, #tpu.memory_space<vmem>>, vector<8x8xf32>,
    %c1_34 = arith.constant 1 : index
    %c0_35 = arith.constant 0 : index
    %c0_36 = arith.constant 0 : index
    %91 = vector.load %arg2[%c1_34, %c0_35, %c0_36] : memref<2x1x8xf32, #tpu.memory_space<vmem>>, vector<1x1x8xf32>
    %92 = vector.shape_cast %91 : vector<1x1x8xf32> to vector<1x8xf32>
    %93 = vector.extract_strided_slice %4 {offsets = [8, 0], sizes = [8, 8], strides = [1, 1]} : vector<16x32xbf16> to vector<8x8xbf16>
    %94 = vector.extract_strided_slice %8 {offsets = [8, 0], sizes = [8, 8], strides = [1, 1]} : vector<16x32xbf16> to vector<8x8xbf16>
    %95 = vector.extract_strided_slice %12 {offsets = [8, 0], sizes = [8, 8], strides = [1, 1]} : vector<16x32xbf16> to vector<8x8xbf16>
    %cst_37 = arith.constant dense<0.000000e+00> : vector<8x8xf32>
    %96 = tpu.matmul %93, %94, %cst_37 {dimension_numbers = #tpu.dot_dimension_numbers<[1], [1], [0], [0], [0, 0, 1, 0], [], []>} : vector<8x8xbf16>, vector<8x8xbf16>, vector<8x8xf32> -> vector<8x8xf32>
    %97 = vector.broadcast %92 : vector<1x8xf32> to vector<8x8xf32>
    %98 = arith.addf %96, %97 : vector<8x8xf32>
    %cst_38 = arith.constant dense<0xFF800000> : vector<8xf32>
    %99 = vector.multi_reduction <maximumf>, %98, %cst_38 [1] : vector<8x8xf32> to vector<8xf32>
    %100 = vector.shape_cast %99 : vector<8xf32> to vector<8x1xf32>
    %101 = vector.broadcast %100 : vector<8x1xf32> to vector<8x8xf32>
    %102 = arith.subf %98, %101 : vector<8x8xf32>
    %103 = math.exp %102 : vector<8x8xf32>
    %cst_39 = arith.constant dense<0.000000e+00> : vector<8xf32>
    %104 = vector.multi_reduction <add>, %103, %cst_39 [1] : vector<8x8xf32> to vector<8xf32>
    %105 = vector.shape_cast %104 : vector<8xf32> to vector<8x1xf32>
    %106 = tpu.reciprocal %105 {approx = true} : vector<8x1xf32> -> vector<8x1xf32>
    %107 = vector.broadcast %106 : vector<8x1xf32> to vector<8x8xf32>
    %108 = arith.mulf %103, %107 : vector<8x8xf32>
    %109 = arith.truncf %108 : vector<8x8xf32> to vector<8x8xbf16>
    %cst_40 = arith.constant dense<0.000000e+00> : vector<8x8xf32>
    %110 = tpu.matmul %109, %95, %cst_40 {dimension_numbers = #tpu.dot_dimension_numbers<[1], [0], [0], [1], [0, 0, 1, 1], [], []>} : vector<8x8xbf16>, vector<8x8xbf16>, vector<8x8xf32> -> vector<8x8xf32>
    %c8_41 = arith.constant 8 : index
    %c0_42 = arith.constant 0 : index
    %111 = vector.load %arg10[%c8_41, %c0_42] : memref<16x32xf32, #tpu.memory_space<vmem>>, vector<8x8xf32>
    tpu.vector_store %arg10[%c8_41, %c0_42], %110 {strides = array<i32>} : memref<16x32xf32, #tpu.memory_space<vmem>>, vector<8x8xf32>,
    %112 = vector.extract_strided_slice %4 {offsets = [8, 8], sizes = [8, 8], strides = [1, 1]} : vector<16x32xbf16> to vector<8x8xbf16>
    %113 = vector.extract_strided_slice %8 {offsets = [8, 8], sizes = [8, 8], strides = [1, 1]} : vector<16x32xbf16> to vector<8x8xbf16>
    %114 = vector.extract_strided_slice %12 {offsets = [8, 8], sizes = [8, 8], strides = [1, 1]} : vector<16x32xbf16> to vector<8x8xbf16>
    %cst_43 = arith.constant dense<0.000000e+00> : vector<8x8xf32>
    %115 = tpu.matmul %112, %113, %cst_43 {dimension_numbers = #tpu.dot_dimension_numbers<[1], [1], [0], [0], [0, 0, 1, 0], [], []>} : vector<8x8xbf16>, vector<8x8xbf16>, vector<8x8xf32> -> vector<8x8xf32>
    %116 = vector.broadcast %92 : vector<1x8xf32> to vector<8x8xf32>
    %117 = arith.addf %115, %116 : vector<8x8xf32>
    %cst_44 = arith.constant dense<0xFF800000> : vector<8xf32>
    %118 = vector.multi_reduction <maximumf>, %117, %cst_44 [1] : vector<8x8xf32> to vector<8xf32>
    %119 = vector.shape_cast %118 : vector<8xf32> to vector<8x1xf32>
    %120 = vector.broadcast %119 : vector<8x1xf32> to vector<8x8xf32>
    %121 = arith.subf %117, %120 : vector<8x8xf32>
    %122 = math.exp %121 : vector<8x8xf32>
    %cst_45 = arith.constant dense<0.000000e+00> : vector<8xf32>
    %123 = vector.multi_reduction <add>, %122, %cst_45 [1] : vector<8x8xf32> to vector<8xf32>
    %124 = vector.shape_cast %123 : vector<8xf32> to vector<8x1xf32>
    %125 = tpu.reciprocal %124 {approx = true} : vector<8x1xf32> -> vector<8x1xf32>
    %126 = vector.broadcast %125 : vector<8x1xf32> to vector<8x8xf32>
    %127 = arith.mulf %122, %126 : vector<8x8xf32>
    %128 = arith.truncf %127 : vector<8x8xf32> to vector<8x8xbf16>
    %cst_46 = arith.constant dense<0.000000e+00> : vector<8x8xf32>
    %129 = tpu.matmul %128, %114, %cst_46 {dimension_numbers = #tpu.dot_dimension_numbers<[1], [0], [0], [1], [0, 0, 1, 1], [], []>} : vector<8x8xbf16>, vector<8x8xbf16>, vector<8x8xf32> -> vector<8x8xf32>
    %c8_47 = arith.constant 8 : index
    %c8_48 = arith.constant 8 : index
    %130 = vector.load %arg10[%c8_47, %c8_48] : memref<16x32xf32, #tpu.memory_space<vmem>>, vector<8x8xf32>
    tpu.vector_store %arg10[%c8_47, %c8_48], %129 {strides = array<i32>} : memref<16x32xf32, #tpu.memory_space<vmem>>, vector<8x8xf32>,
    %131 = vector.extract_strided_slice %4 {offsets = [8, 16], sizes = [8, 8], strides = [1, 1]} : vector<16x32xbf16> to vector<8x8xbf16>
    %132 = vector.extract_strided_slice %8 {offsets = [8, 16], sizes = [8, 8], strides = [1, 1]} : vector<16x32xbf16> to vector<8x8xbf16>
    %133 = vector.extract_strided_slice %12 {offsets = [8, 16], sizes = [8, 8], strides = [1, 1]} : vector<16x32xbf16> to vector<8x8xbf16>
    %cst_49 = arith.constant dense<0.000000e+00> : vector<8x8xf32>
    %134 = tpu.matmul %131, %132, %cst_49 {dimension_numbers = #tpu.dot_dimension_numbers<[1], [1], [0], [0], [0, 0, 1, 0], [], []>} : vector<8x8xbf16>, vector<8x8xbf16>, vector<8x8xf32> -> vector<8x8xf32>
    %135 = vector.broadcast %92 : vector<1x8xf32> to vector<8x8xf32>
    %136 = arith.addf %134, %135 : vector<8x8xf32>
    %cst_50 = arith.constant dense<0xFF800000> : vector<8xf32>
    %137 = vector.multi_reduction <maximumf>, %136, %cst_50 [1] : vector<8x8xf32> to vector<8xf32>
    %138 = vector.shape_cast %137 : vector<8xf32> to vector<8x1xf32>
    %139 = vector.broadcast %138 : vector<8x1xf32> to vector<8x8xf32>
    %140 = arith.subf %136, %139 : vector<8x8xf32>
    %141 = math.exp %140 : vector<8x8xf32>
    %cst_51 = arith.constant dense<0.000000e+00> : vector<8xf32>
    %142 = vector.multi_reduction <add>, %141, %cst_51 [1] : vector<8x8xf32> to vector<8xf32>
    %143 = vector.shape_cast %142 : vector<8xf32> to vector<8x1xf32>
    %144 = tpu.reciprocal %143 {approx = true} : vector<8x1xf32> -> vector<8x1xf32>
    %145 = vector.broadcast %144 : vector<8x1xf32> to vector<8x8xf32>
    %146 = arith.mulf %141, %145 : vector<8x8xf32>
    %147 = arith.truncf %146 : vector<8x8xf32> to vector<8x8xbf16>
    %cst_52 = arith.constant dense<0.000000e+00> : vector<8x8xf32>
    %148 = tpu.matmul %147, %133, %cst_52 {dimension_numbers = #tpu.dot_dimension_numbers<[1], [0], [0], [1], [0, 0, 1, 1], [], []>} : vector<8x8xbf16>, vector<8x8xbf16>, vector<8x8xf32> -> vector<8x8xf32>
    %c8_53 = arith.constant 8 : index
    %c16_54 = arith.constant 16 : index
    %149 = vector.load %arg10[%c8_53, %c16_54] : memref<16x32xf32, #tpu.memory_space<vmem>>, vector<8x8xf32>
    tpu.vector_store %arg10[%c8_53, %c16_54], %148 {strides = array<i32>} : memref<16x32xf32, #tpu.memory_space<vmem>>, vector<8x8xf32>,
    %150 = vector.extract_strided_slice %4 {offsets = [8, 24], sizes = [8, 8], strides = [1, 1]} : vector<16x32xbf16> to vector<8x8xbf16>
    %151 = vector.extract_strided_slice %8 {offsets = [8, 24], sizes = [8, 8], strides = [1, 1]} : vector<16x32xbf16> to vector<8x8xbf16>
    %152 = vector.extract_strided_slice %12 {offsets = [8, 24], sizes = [8, 8], strides = [1, 1]} : vector<16x32xbf16> to vector<8x8xbf16>
    %cst_55 = arith.constant dense<0.000000e+00> : vector<8x8xf32>
    %153 = tpu.matmul %150, %151, %cst_55 {dimension_numbers = #tpu.dot_dimension_numbers<[1], [1], [0], [0], [0, 0, 1, 0], [], []>} : vector<8x8xbf16>, vector<8x8xbf16>, vector<8x8xf32> -> vector<8x8xf32>
    %154 = vector.broadcast %92 : vector<1x8xf32> to vector<8x8xf32>
    %155 = arith.addf %153, %154 : vector<8x8xf32>
    %cst_56 = arith.constant dense<0xFF800000> : vector<8xf32>
    %156 = vector.multi_reduction <maximumf>, %155, %cst_56 [1] : vector<8x8xf32> to vector<8xf32>
    %157 = vector.shape_cast %156 : vector<8xf32> to vector<8x1xf32>
    %158 = vector.broadcast %157 : vector<8x1xf32> to vector<8x8xf32>
    %159 = arith.subf %155, %158 : vector<8x8xf32>
    %160 = math.exp %159 : vector<8x8xf32>
    %cst_57 = arith.constant dense<0.000000e+00> : vector<8xf32>
    %161 = vector.multi_reduction <add>, %160, %cst_57 [1] : vector<8x8xf32> to vector<8xf32>
    %162 = vector.shape_cast %161 : vector<8xf32> to vector<8x1xf32>
    %163 = tpu.reciprocal %162 {approx = true} : vector<8x1xf32> -> vector<8x1xf32>
    %164 = vector.broadcast %163 : vector<8x1xf32> to vector<8x8xf32>
    %165 = arith.mulf %160, %164 : vector<8x8xf32>
    %166 = arith.truncf %165 : vector<8x8xf32> to vector<8x8xbf16>
    %cst_58 = arith.constant dense<0.000000e+00> : vector<8x8xf32>
    %167 = tpu.matmul %166, %152, %cst_58 {dimension_numbers = #tpu.dot_dimension_numbers<[1], [0], [0], [1], [0, 0, 1, 1], [], []>} : vector<8x8xbf16>, vector<8x8xbf16>, vector<8x8xf32> -> vector<8x8xf32>
    %c8_59 = arith.constant 8 : index
    %c24_60 = arith.constant 24 : index
    %168 = vector.load %arg10[%c8_59, %c24_60] : memref<16x32xf32, #tpu.memory_space<vmem>>, vector<8x8xf32>
    tpu.vector_store %arg10[%c8_59, %c24_60], %167 {strides = array<i32>} : memref<16x32xf32, #tpu.memory_space<vmem>>, vector<8x8xf32>,
    %c0_61 = arith.constant 0 : index
    %c0_62 = arith.constant 0 : index
    %169 = vector.load %arg10[%c0_61, %c0_62] : memref<16x32xf32, #tpu.memory_space<vmem>>, vector<16x32xf32>
    %c0_63 = arith.constant 0 : index
    %c0_64 = arith.constant 0 : index
    %170 = vector.load %arg7[%c0_63, %c0_64] : memref<6x32xf32, #tpu.memory_space<vmem>>, vector<6x32xf32>
    %171 = vector.extract_strided_slice %170 {offsets = [0, 0], sizes = [1, 32], strides = [1, 1]} : vector<6x32xf32> to vector<1x32xf32>
    %172 = vector.extract_strided_slice %170 {offsets = [1, 0], sizes = [1, 32], strides = [1, 1]} : vector<6x32xf32> to vector<1x32xf32>
    %173 = vector.extract_strided_slice %170 {offsets = [2, 0], sizes = [1, 32], strides = [1, 1]} : vector<6x32xf32> to vector<1x32xf32>
    %174 = vector.extract_strided_slice %170 {offsets = [3, 0], sizes = [1, 32], strides = [1, 1]} : vector<6x32xf32> to vector<1x32xf32>
    %175 = vector.extract_strided_slice %170 {offsets = [4, 0], sizes = [1, 32], strides = [1, 1]} : vector<6x32xf32> to vector<1x32xf32>
    %176 = vector.extract_strided_slice %170 {offsets = [5, 0], sizes = [1, 32], strides = [1, 1]} : vector<6x32xf32> to vector<1x32xf32>
    %177 = arith.truncf %169 : vector<16x32xf32> to vector<16x32xbf16>
    %c0_65 = arith.constant 0 : index
    %c0_66 = arith.constant 0 : index
    %178 = vector.load %arg4[%c0_65, %c0_66] : memref<32x32xbf16, #tpu.memory_space<vmem>>, vector<32x32xbf16>
    %cst_67 = arith.constant dense<0.000000e+00> : vector<16x32xf32>
    %179 = tpu.matmul %177, %178, %cst_67 {dimension_numbers = #tpu.dot_dimension_numbers<[1], [0], [0], [1], [0, 0, 1, 1], [], []>} : vector<16x32xbf16>, vector<32x32xbf16>, vector<16x32xf32> -> vector<16x32xf32>
    %180 = vector.broadcast %171 : vector<1x32xf32> to vector<16x32xf32>
    %181 = arith.addf %179, %180 : vector<16x32xf32>
    %182 = arith.extf %0 : vector<16x32xbf16> to vector<16x32xf32>
    %183 = arith.addf %181, %182 : vector<16x32xf32>
    %cst_68 = arith.constant dense<0.000000e+00> : vector<16xf32>
    %184 = vector.multi_reduction <add>, %183, %cst_68 [1] : vector<16x32xf32> to vector<16xf32>
    %185 = vector.shape_cast %184 : vector<16xf32> to vector<16x1xf32>
    %cst_69 = arith.constant 3.200000e+01 : f32
    %186 = vector.broadcast %cst_69 : f32 to vector<16x1xf32>
    %187 = arith.divf %185, %186 : vector<16x1xf32>
    %188 = vector.broadcast %187 : vector<16x1xf32> to vector<16x32xf32>
    %189 = arith.subf %183, %188 : vector<16x32xf32>
    %190 = arith.mulf %189, %189 : vector<16x32xf32>
    %cst_70 = arith.constant dense<0.000000e+00> : vector<16xf32>
    %191 = vector.multi_reduction <add>, %190, %cst_70 [1] : vector<16x32xf32> to vector<16xf32>
    %192 = vector.shape_cast %191 : vector<16xf32> to vector<16x1xf32>
    %cst_71 = arith.constant 3.200000e+01 : f32
    %193 = vector.broadcast %cst_71 : f32 to vector<16x1xf32>
    %194 = arith.divf %192, %193 : vector<16x1xf32>
    %195 = vector.broadcast %187 : vector<16x1xf32> to vector<16x32xf32>
    %196 = arith.subf %183, %195 : vector<16x32xf32>
    %cst_72 = arith.constant 9.99999974E-6 : f32
    %197 = vector.broadcast %cst_72 : f32 to vector<16x1xf32>
    %198 = arith.addf %194, %197 : vector<16x1xf32>
    %199 = math.rsqrt %198 : vector<16x1xf32>
    %200 = vector.broadcast %199 : vector<16x1xf32> to vector<16x32xf32>
    %201 = arith.mulf %196, %200 : vector<16x32xf32>
    %202 = vector.broadcast %172 : vector<1x32xf32> to vector<16x32xf32>
    %203 = arith.mulf %201, %202 : vector<16x32xf32>
    %204 = vector.broadcast %173 : vector<1x32xf32> to vector<16x32xf32>
    %205 = arith.addf %203, %204 : vector<16x32xf32>
    %206 = arith.truncf %205 : vector<16x32xf32> to vector<16x32xbf16>
    %c0_73 = arith.constant 0 : index
    %c0_74 = arith.constant 0 : index
    %207 = vector.load %arg5[%c0_73, %c0_74] : memref<32x64xbf16, #tpu.memory_space<vmem>>, vector<32x64xbf16>
    %cst_75 = arith.constant dense<0.000000e+00> : vector<16x64xf32>
    %208 = tpu.matmul %206, %207, %cst_75 {dimension_numbers = #tpu.dot_dimension_numbers<[1], [0], [0], [1], [0, 0, 1, 1], [], []>} : vector<16x32xbf16>, vector<32x64xbf16>, vector<16x64xf32> -> vector<16x64xf32>
    %c0_76 = arith.constant 0 : index
    %c0_77 = arith.constant 0 : index
    %209 = vector.load %arg8[%c0_76, %c0_77] : memref<1x64xf32, #tpu.memory_space<vmem>>, vector<1x64xf32>
    %210 = vector.broadcast %209 : vector<1x64xf32> to vector<16x64xf32>
    %211 = arith.addf %208, %210 : vector<16x64xf32>
    %cst_78 = arith.constant 0.000000e+00 : f32
    %212 = vector.broadcast %cst_78 : f32 to vector<16x64xf32>
    %213 = arith.maximumf %211, %212 : vector<16x64xf32>
    %214 = arith.truncf %213 : vector<16x64xf32> to vector<16x64xbf16>
    %c0_79 = arith.constant 0 : index
    %c0_80 = arith.constant 0 : index
    %215 = vector.load %arg6[%c0_79, %c0_80] : memref<64x32xbf16, #tpu.memory_space<vmem>>, vector<64x32xbf16>
    %cst_81 = arith.constant dense<0.000000e+00> : vector<16x32xf32>
    %216 = tpu.matmul %214, %215, %cst_81 {dimension_numbers = #tpu.dot_dimension_numbers<[1], [0], [0], [1], [0, 0, 1, 1], [], []>} : vector<16x64xbf16>, vector<64x32xbf16>, vector<16x32xf32> -> vector<16x32xf32>
    %217 = vector.broadcast %174 : vector<1x32xf32> to vector<16x32xf32>
    %218 = arith.addf %216, %217 : vector<16x32xf32>
    %219 = arith.addf %218, %205 : vector<16x32xf32>
    %cst_82 = arith.constant dense<0.000000e+00> : vector<16xf32>
    %220 = vector.multi_reduction <add>, %219, %cst_82 [1] : vector<16x32xf32> to vector<16xf32>
    %221 = vector.shape_cast %220 : vector<16xf32> to vector<16x1xf32>
    %cst_83 = arith.constant 3.200000e+01 : f32
    %222 = vector.broadcast %cst_83 : f32 to vector<16x1xf32>
    %223 = arith.divf %221, %222 : vector<16x1xf32>
    %224 = vector.broadcast %223 : vector<16x1xf32> to vector<16x32xf32>
    %225 = arith.subf %219, %224 : vector<16x32xf32>
    %226 = arith.mulf %225, %225 : vector<16x32xf32>
    %cst_84 = arith.constant dense<0.000000e+00> : vector<16xf32>
    %227 = vector.multi_reduction <add>, %226, %cst_84 [1] : vector<16x32xf32> to vector<16xf32>
    %228 = vector.shape_cast %227 : vector<16xf32> to vector<16x1xf32>
    %cst_85 = arith.constant 3.200000e+01 : f32
    %229 = vector.broadcast %cst_85 : f32 to vector<16x1xf32>
    %230 = arith.divf %228, %229 : vector<16x1xf32>
    %231 = vector.broadcast %223 : vector<16x1xf32> to vector<16x32xf32>
    %232 = arith.subf %219, %231 : vector<16x32xf32>
    %cst_86 = arith.constant 9.99999974E-6 : f32
    %233 = vector.broadcast %cst_86 : f32 to vector<16x1xf32>
    %234 = arith.addf %230, %233 : vector<16x1xf32>
    %235 = math.rsqrt %234 : vector<16x1xf32>
    %236 = vector.broadcast %235 : vector<16x1xf32> to vector<16x32xf32>
    %237 = arith.mulf %232, %236 : vector<16x32xf32>
    %238 = vector.broadcast %175 : vector<1x32xf32> to vector<16x32xf32>
    %239 = arith.mulf %237, %238 : vector<16x32xf32>
    %240 = vector.broadcast %176 : vector<1x32xf32> to vector<16x32xf32>
    %241 = arith.addf %239, %240 : vector<16x32xf32>
    %242 = arith.truncf %241 : vector<16x32xf32> to vector<16x32xbf16>
    %c0_87 = arith.constant 0 : index
    %c0_88 = arith.constant 0 : index
    %243 = vector.load %arg9[%c0_87, %c0_88] : memref<16x32xbf16, #tpu.memory_space<vmem>>, vector<16x32xbf16>
    tpu.vector_store %arg9[%c0_87, %c0_88], %242 {strides = array<i32>} : memref<16x32xbf16, #tpu.memory_space<vmem>>, vector<16x32xbf16>,
    return
  }
  func.func @transform_0(%arg0: i32) -> (i32, i32) {
    %c0_i32 = arith.constant 0 : i32
    %c0_i32_0 = arith.constant 0 : i32
    return %arg0, %c0_i32 : i32, i32
  }
  func.func @transform_1(%arg0: i32) -> (i32, i32, i32) {
    %c0_i32 = arith.constant 0 : i32
    %c0_i32_0 = arith.constant 0 : i32
    %c0_i32_1 = arith.constant 0 : i32
    return %arg0, %c0_i32, %c0_i32_0 : i32, i32, i32
  }
  func.func @transform_2(%arg0: i32) -> (i32, i32, i32) {
    %c0_i32 = arith.constant 0 : i32
    %c0_i32_0 = arith.constant 0 : i32
    %c0_i32_1 = arith.constant 0 : i32
    %c0_i32_2 = arith.constant 0 : i32
    return %c0_i32, %c0_i32_0, %c0_i32_1 : i32, i32, i32
  }
  func.func @transform_3(%arg0: i32) -> (i32, i32) {
    %c0_i32 = arith.constant 0 : i32
    %c0_i32_0 = arith.constant 0 : i32
    %c0_i32_1 = arith.constant 0 : i32
    return %c0_i32, %c0_i32_0 : i32, i32
  }
  func.func @transform_4(%arg0: i32) -> (i32, i32) {
    %c0_i32 = arith.constant 0 : i32
    %c0_i32_0 = arith.constant 0 : i32
    %c0_i32_1 = arith.constant 0 : i32
    return %c0_i32, %c0_i32_0 : i32, i32
  }
  func.func @transform_5(%arg0: i32) -> (i32, i32) {
    %c0_i32 = arith.constant 0 : i32
    %c0_i32_0 = arith.constant 0 : i32
    %c0_i32_1 = arith.constant 0 : i32
    return %c0_i32, %c0_i32_0 : i32, i32
  }
  func.func @transform_6(%arg0: i32) -> (i32, i32) {
    %c0_i32 = arith.constant 0 : i32
    %c0_i32_0 = arith.constant 0 : i32
    %c0_i32_1 = arith.constant 0 : i32
    return %c0_i32, %c0_i32_0 : i32, i32
  }
  func.func @transform_7(%arg0: i32) -> (i32, i32) {
    %c0_i32 = arith.constant 0 : i32
    %c0_i32_0 = arith.constant 0 : i32
    %c0_i32_1 = arith.constant 0 : i32
    return %c0_i32, %c0_i32_0 : i32, i32
  }
  func.func @transform_8(%arg0: i32) -> (i32, i32) {
    %c0_i32 = arith.constant 0 : i32
    %c0_i32_0 = arith.constant 0 : i32
    return %arg0, %c0_i32 : i32, i32
  }
}

</mosaic_0001>

<llo_original>
// kernel: tpu_custom_call.1
$region0: #{tpu_custom_call.1}
  #allocation0 [shape = 'u32[]', space=smem, size = 0x4, offset = 0x4, fixed_abs, tag = 'smem constant byte address 0x4 - core index']
  #allocation1 [shape = 'u32[144,128]{1,0:T(1,128)}', space=vmem, size = 0x12000, scoped, tag = 'internal scratch']
  #allocation2 [shape = 'f32[16,32]{1,0:T(8,128)}', space=vmem, size = 0x2000, scoped, tag = 'scratch operand']
  %s0 = inlined_call_operand.hbm [shape: bf16[16,32], index: 0, kind: input, shape index: {}]
  %s1 = inlined_call_operand.hbm [shape: f32[2,1,8], index: 1, kind: input, shape index: {}]
  %s2 = inlined_call_operand.vmem [shape: bf16[3,32,32], index: 2, kind: input, shape index: {}]
  %s3 = inlined_call_operand.hbm [shape: bf16[32,32], index: 3, kind: input, shape index: {}]
  %s4 = inlined_call_operand.hbm [shape: bf16[32,64], index: 4, kind: input, shape index: {}]
  %s5 = inlined_call_operand.vmem [shape: bf16[64,32], index: 5, kind: input, shape index: {}]
  %s6 = inlined_call_operand.vmem [shape: f32[6,32], index: 6, kind: input, shape index: {}]
  %s7 = inlined_call_operand.vmem [shape: f32[1,64], index: 7, kind: input, shape index: {}]
  %s8 = inlined_call_operand.hbm [shape: bf16[16,32], index: 8, kind: output, shape index: {}]
  %s9 = sld [smem:[#allocation0]]
  $region58: #{tpu_custom_call.1} parent=0
    _
  %s11 = ssub.s32 1, %s9
  %s12 = scalar_select 0, %s11, %s9
  $region1: #{tpu_custom_call.1} parent=0
    #allocation3 [shape = 'u8[4096]{0}', space=vmem, size = 0x1000, scoped, tag = 'input window, operand 0, single buffered']
    #allocation4 [shape = 's32[1]{0}', space=sflag, size = 0x4, scoped, tag = 'scoped memory for tpu_custom_call.1']
    #allocation5 [shape = 's32[1]{0}', space=sflag, size = 0x4, scoped, tag = 'scoped memory for tpu_custom_call.1']
    #allocation6 [shape = 'u8[1024]{0}', space=vmem, size = 0x400, scoped, tag = 'input window, operand 1, single buffered']
    #allocation7 [shape = 's32[1]{0}', space=sflag, size = 0x4, scoped, tag = 'scoped memory for tpu_custom_call.1']
    #allocation8 [shape = 'u8[8192]{0}', space=vmem, size = 0x2000, scoped, tag = 'input window, operand 3, single buffered']
    #allocation9 [shape = 'u8[8192]{0}', space=vmem, size = 0x2000, scoped, tag = 'input window, operand 4, single buffered']
    #allocation10 [shape = 's32[1]{0}', space=sflag, size = 0x4, scoped, tag = 'scoped memory for tpu_custom_call.1']
    #allocation11 [shape = 'u8[4096]{0}', space=vmem, size = 0x1000, scoped, tag = 'output window, operand 0, single buffered']
    %13 = vsyncpa [#allocation4], 0
    %14 = vsyncpa [#allocation7], 0
    %15 = vsyncpa [#allocation10], 0
    %16 = vsyncpa [#allocation5], 0
    // Predicated region
    $region2: #{tpu_custom_call.1} parent=1 // pred_check
      _
    $region3: #{tpu_custom_call.1} parent=1 // pred_check_branch
      %18 = sbr.rel (0) target = $region5
    $region4: #{tpu_custom_call.1} parent=1 // pred_region
      %s20 = ssub.s32 128, 128
      %21 = vsyncadd [#allocation4], %s20
      %s22 = sshll.u32 [#allocation3], 4
      %s23 = int_to_ptr.vmem [resolvable:$true] %s22
      %28 = dma.hbm_to_vmem [thread:$0]  %s0, 128, %s23, [#allocation4], 64, 64, 4
    $region5: #{tpu_custom_call.1} parent=1 // pred_fallthru
      _
    // Predicated region
    $region6: #{tpu_custom_call.1} parent=1 // pred_check
      _
    $region7: #{tpu_custom_call.1} parent=1 // pred_check_branch
      %30 = sbr.rel (0) target = $region9
    $region8: #{tpu_custom_call.1} parent=1 // pred_region
      %s32 = ssub.s32 32, 32
      %33 = vsyncadd [#allocation7], %s32
      %s34 = sshll.u32 [#allocation6], 4
      %s35 = int_to_ptr.vmem [resolvable:$true] %s34
      %40 = dma.hbm_to_vmem [thread:$0]  %s1, 32, %s35, [#allocation7], 16, 16, 1
    $region9: #{tpu_custom_call.1} parent=1 // pred_fallthru
      _
    // Predicated region
    $region10: #{tpu_custom_call.1} parent=1 // pred_check
      _
    $region11: #{tpu_custom_call.1} parent=1 // pred_check_branch
      %42 = sbr.rel (0) target = $region13
    $region12: #{tpu_custom_call.1} parent=1 // pred_region
      _
    $region13: #{tpu_custom_call.1} parent=1 // pred_fallthru
      _
    // Predicated region
    $region14: #{tpu_custom_call.1} parent=1 // pred_check
      _
    $region15: #{tpu_custom_call.1} parent=1 // pred_check_branch
      %44 = sbr.rel (0) target = $region17
    $region16: #{tpu_custom_call.1} parent=1 // pred_region
      %s46 = ssub.s32 256, 256
      %47 = vsyncadd [#allocation7], %s46
      %s48 = sshll.u32 [#allocation8], 4
      %s49 = int_to_ptr.vmem [resolvable:$true] %s48
      %54 = dma.hbm_to_vmem [thread:$0]  %s3, 256, %s49, [#allocation7], 64, 64, 4
    $region17: #{tpu_custom_call.1} parent=1 // pred_fallthru
      _
    // Predicated region
    $region18: #{tpu_custom_call.1} parent=1 // pred_check
      _
    $region19: #{tpu_custom_call.1} parent=1 // pred_check_branch
      %56 = sbr.rel (0) target = $region21
    $region20: #{tpu_custom_call.1} parent=1 // pred_region
      %s58 = ssub.s32 256, 256
      %59 = vsyncadd [#allocation10], %s58
      %s60 = sshll.u32 [#allocation9], 4
      %s61 = int_to_ptr.vmem [resolvable:$true] %s60
      %66 = dma.hbm_to_vmem [thread:$0]  %s4, 256, %s61, [#allocation10], 64, 64, 4
    $region21: #{tpu_custom_call.1} parent=1 // pred_fallthru
      _
    // Predicated region
    $region22: #{tpu_custom_call.1} parent=1 // pred_check
      _
    $region23: #{tpu_custom_call.1} parent=1 // pred_check_branch
      %68 = sbr.rel (0) target = $region25
    $region24: #{tpu_custom_call.1} parent=1 // pred_region
      _
    $region25: #{tpu_custom_call.1} parent=1 // pred_fallthru
      _
    // Predicated region
    $region26: #{tpu_custom_call.1} parent=1 // pred_check
      _
    $region27: #{tpu_custom_call.1} parent=1 // pred_check_branch
      %70 = sbr.rel (0) target = $region29
    $region28: #{tpu_custom_call.1} parent=1 // pred_region
      _
    $region29: #{tpu_custom_call.1} parent=1 // pred_fallthru
      _
    // Predicated region
    $region30: #{tpu_custom_call.1} parent=1 // pred_check
      _
    $region31: #{tpu_custom_call.1} parent=1 // pred_check_branch
      %72 = sbr.rel (0) target = $region33
    $region32: #{tpu_custom_call.1} parent=1 // pred_region
      _
    $region33: #{tpu_custom_call.1} parent=1 // pred_fallthru
      _
    // Predicated region
    $region34: #{tpu_custom_call.1} parent=1 // pred_check
      _
    $region35: #{tpu_custom_call.1} parent=1 // pred_check_branch
      %74 = sbr.rel (0) target = $region37
    $region36: #{tpu_custom_call.1} parent=1 // pred_region
      %75 = dma.done [#allocation4], 128
    $region37: #{tpu_custom_call.1} parent=1 // pred_fallthru
      _
    // Predicated region
    $region38: #{tpu_custom_call.1} parent=1 // pred_check
      _
    $region39: #{tpu_custom_call.1} parent=1 // pred_check_branch
      %77 = sbr.rel (0) target = $region41
    $region40: #{tpu_custom_call.1} parent=1 // pred_region
      %78 = dma.done [#allocation7], 32
    $region41: #{tpu_custom_call.1} parent=1 // pred_fallthru
      _
    // Predicated region
    $region42: #{tpu_custom_call.1} parent=1 // pred_check
      _
    $region43: #{tpu_custom_call.1} parent=1 // pred_check_branch
      %80 = sbr.rel (0) target = $region45
    $region44: #{tpu_custom_call.1} parent=1 // pred_region
      %81 = dma.done [#allocation7], 256
    $region45: #{tpu_custom_call.1} parent=1 // pred_fallthru
      _
    // Predicated region
    $region46: #{tpu_custom_call.1} parent=1 // pred_check
      _
    $region47: #{tpu_custom_call.1} parent=1 // pred_check_branch
      %83 = sbr.rel (0) target = $region49
    $region48: #{tpu_custom_call.1} parent=1 // pred_region
      %84 = dma.done [#allocation10], 256
    $region49: #{tpu_custom_call.1} parent=1 // pred_fallthru
      _
    %v86 = vld [vmem:[#allocation3] sm:$0xf]
    %v87 = vld [vmem:[#allocation3 + $0x4] sm:$0xf]
    %v88 = vld [vmem:[%s2] sm:$0xf]
    %v89 = vld [vmem:[%s2 + $0x4] sm:$0xf]
    %v90 = vld [vmem:[%s2 + $0x8] sm:$0xf]
    %v91 = vld [vmem:[%s2 + $0xc] sm:$0xf]
    %v94 = vunpack.c.l.b16 %v86
    %v95 = vunpack.c.l.b16 %v87
    %v96 = vpack.c.b16 %v95, %v94
    %v101 = vunpack.c.l.b16 %v88
    %v102 = vunpack.c.l.b16 %v89
    %v103 = vunpack.c.l.b16 %v90
    %v104 = vunpack.c.l.b16 %v91
    %v105 = vpack.c.b16 %v102, %v101
    %v106 = vpack.c.b16 %v104, %v103
    %vm109 = vcmask 261120
    %v111 = vsel %vm109, %v96, 0
    %113 = vmatprep.subr.bf16.mxu0 0
    %114 = vmatpush1.bf16.msra.mxu0 0
    %115 = vmatprep.subr.bf16.mxu0 0
    %116 = vmatpush1.bf16.msra.mxu0 0
    %117 = vmatprep.subr.bf16.mxu0 0
    %118 = vmatpush1.bf16.msra.mxu0 0
    %119 = vmatprep.subr.bf16.mxu0 0
    %120 = vmatpush1.bf16.msra.mxu0 0
    %121 = vmatprep.subr.bf16.mxu0 0
    %122 = vmatpush1.bf16.msra.mxu0 0
    %123 = vmatprep.subr.bf16.mxu0 0
    %124 = vmatpush1.bf16.msra.mxu0 0
    %125 = vmatprep.subr.bf16.mxu0 0
    %126 = vmatpush1.bf16.msra.mxu0 %v106
    %127 = vmatprep.subr.bf16.mxu0 0
    %128 = vmatpush1.bf16.msra.mxu0 %v105
    %129 = vmatprep.subr.bf16.mxu0 0
    %130 = vmatpush2.bf16.msra.mxu0 0
    %131 = vmatprep.subr.bf16.mxu0 0
    %132 = vmatpush2.bf16.msra.mxu0 0
    %133 = vmatprep.subr.bf16.mxu0 0
    %134 = vmatpush2.bf16.msra.mxu0 0
    %135 = vmatprep.subr.bf16.mxu0 0
    %136 = vmatpush2.bf16.msra.mxu0 0
    %137 = vmatprep.subr.bf16.mxu0 0
    %138 = vmatpush2.bf16.msra.mxu0 0
    %139 = vmatprep.subr.bf16.mxu0 0
    %140 = vmatpush2.bf16.msra.mxu0 0
    %141 = vmatprep.subr.bf16.mxu0 0
    %142 = vmatpush2.bf16.msra.mxu0 0
    %143 = vmatprep.subr.bf16.mxu0 0
    %144 = vmatpush2.bf16.msra.mxu0 0
    %145 = vmatprep.mubr.bf16.mxu0 0
    %146 = vmatmul.mubr.bf16.gmra.mxu0 %v111
    %v147 = vpop.f32.mrf.mxu0
    %v148 = vadd.f32 0.0, %v147
    %v149 = vpop.f32.mrf.mxu0
    %v150 = vpop.f32.mrf.mxu0
    %v151 = vadd.f32 0.0, %v150
    %v152 = vpop.f32.mrf.mxu0
    %153 = vdwg.mxu0
    %v154 = vpack.c.bf16 %v151, %v148
    %s155 = scalar_lea.vmem %s2, 16
    %v156 = vld [vmem:[%s155] sm:$0xf]
    %v157 = vld [vmem:[%s155 + $0x4] sm:$0xf]
    %v158 = vld [vmem:[%s155 + $0x8] sm:$0xf]
    %v159 = vld [vmem:[%s155 + $0xc] sm:$0xf]
    %v164 = vunpack.c.l.b16 %v156
    %v165 = vunpack.c.l.b16 %v157
    %v166 = vunpack.c.l.b16 %v158
    %v167 = vunpack.c.l.b16 %v159
    %v168 = vpack.c.b16 %v165, %v164
    %v169 = vpack.c.b16 %v167, %v166
    %172 = vmatprep.subr.bf16.mxu0 0
    %173 = vmatpush1.bf16.msra.mxu0 0
    %174 = vmatprep.subr.bf16.mxu0 0
    %175 = vmatpush1.bf16.msra.mxu0 0
    %176 = vmatprep.subr.bf16.mxu0 0
    %177 = vmatpush1.bf16.msra.mxu0 0
    %178 = vmatprep.subr.bf16.mxu0 0
    %179 = vmatpush1.bf16.msra.mxu0 0
    %180 = vmatprep.subr.bf16.mxu0 0
    %181 = vmatpush1.bf16.msra.mxu0 0
    %182 = vmatprep.subr.bf16.mxu0 0
    %183 = vmatpush1.bf16.msra.mxu0 0
    %184 = vmatprep.subr.bf16.mxu0 0
    %185 = vmatpush1.bf16.msra.mxu0 %v169
    %186 = vmatprep.subr.bf16.mxu0 0
    %187 = vmatpush1.bf16.msra.mxu0 %v168
    %188 = vmatprep.subr.bf16.mxu0 0
    %189 = vmatpush2.bf16.msra.mxu0 0
    %190 = vmatprep.subr.bf16.mxu0 0
    %191 = vmatpush2.bf16.msra.mxu0 0
    %192 = vmatprep.subr.bf16.mxu0 0
    %193 = vmatpush2.bf16.msra.mxu0 0
    %194 = vmatprep.subr.bf16.mxu0 0
    %195 = vmatpush2.bf16.msra.mxu0 0
    %196 = vmatprep.subr.bf16.mxu0 0
    %197 = vmatpush2.bf16.msra.mxu0 0
    %198 = vmatprep.subr.bf16.mxu0 0
    %199 = vmatpush2.bf16.msra.mxu0 0
    %200 = vmatprep.subr.bf16.mxu0 0
    %201 = vmatpush2.bf16.msra.mxu0 0
    %202 = vmatprep.subr.bf16.mxu0 0
    %203 = vmatpush2.bf16.msra.mxu0 0
    %204 = vmatprep.mubr.bf16.mxu0 0
    %205 = vmatmul.mubr.bf16.gmra.mxu0 %v111
    %v206 = vpop.f32.mrf.mxu0
    %v207 = vadd.f32 0.0, %v206
    %v208 = vpop.f32.mrf.mxu0
    %v209 = vpop.f32.mrf.mxu0
    %v210 = vadd.f32 0.0, %v209
    %v211 = vpop.f32.mrf.mxu0
    %212 = vdwg.mxu0
    %v213 = vpack.c.bf16 %v210, %v207
    %s214 = scalar_lea.vmem %s2, 32
    %v215 = vld [vmem:[%s214] sm:$0xf]
    %v216 = vld [vmem:[%s214 + $0x4] sm:$0xf]
    %v217 = vld [vmem:[%s214 + $0x8] sm:$0xf]
    %v218 = vld [vmem:[%s214 + $0xc] sm:$0xf]
    %v223 = vunpack.c.l.b16 %v215
    %v224 = vunpack.c.l.b16 %v216
    %v225 = vunpack.c.l.b16 %v217
    %v226 = vunpack.c.l.b16 %v218
    %v227 = vpack.c.b16 %v224, %v223
    %v228 = vpack.c.b16 %v226, %v225
    %231 = vmatprep.subr.bf16.mxu0 0
    %232 = vmatpush1.bf16.msra.mxu0 0
    %233 = vmatprep.subr.bf16.mxu0 0
    %234 = vmatpush1.bf16.msra.mxu0 0
    %235 = vmatprep.subr.bf16.mxu0 0
    %236 = vmatpush1.bf16.msra.mxu0 0
    %237 = vmatprep.subr.bf16.mxu0 0
    %238 = vmatpush1.bf16.msra.mxu0 0
    %239 = vmatprep.subr.bf16.mxu0 0
    %240 = vmatpush1.bf16.msra.mxu0 0
    %241 = vmatprep.subr.bf16.mxu0 0
    %242 = vmatpush1.bf16.msra.mxu0 0
    %243 = vmatprep.subr.bf16.mxu0 0
    %244 = vmatpush1.bf16.msra.mxu0 %v228
    %245 = vmatprep.subr.bf16.mxu0 0
    %246 = vmatpush1.bf16.msra.mxu0 %v227
    %247 = vmatprep.subr.bf16.mxu0 0
    %248 = vmatpush2.bf16.msra.mxu0 0
    %249 = vmatprep.subr.bf16.mxu0 0
    %250 = vmatpush2.bf16.msra.mxu0 0
    %251 = vmatprep.subr.bf16.mxu0 0
    %252 = vmatpush2.bf16.msra.mxu0 0
    %253 = vmatprep.subr.bf16.mxu0 0
    %254 = vmatpush2.bf16.msra.mxu0 0
    %255 = vmatprep.subr.bf16.mxu0 0
    %256 = vmatpush2.bf16.msra.mxu0 0
    %257 = vmatprep.subr.bf16.mxu0 0
    %258 = vmatpush2.bf16.msra.mxu0 0
    %259 = vmatprep.subr.bf16.mxu0 0
    %260 = vmatpush2.bf16.msra.mxu0 0
    %261 = vmatprep.subr.bf16.mxu0 0
    %262 = vmatpush2.bf16.msra.mxu0 0
    %263 = vmatprep.mubr.bf16.mxu0 0
    %264 = vmatmul.mubr.bf16.gmra.mxu0 %v111
    %v265 = vpop.f32.mrf.mxu0
    %v266 = vadd.f32 0.0, %v265
    %v267 = vpop.f32.mrf.mxu0
    %v268 = vpop.f32.mrf.mxu0
    %v269 = vadd.f32 0.0, %v268
    %v270 = vpop.f32.mrf.mxu0
    %271 = vdwg.mxu0
    %v272 = vpack.c.bf16 %v269, %v266
    %v273 = vld [vmem:[#allocation6] sm:$0x1]
    %v275 = vlaneseq
    %v276 = vshrl.u32 %v275, 7
    %v277 = vsub.s32 0, %v276
    %v278 = vrot.slane %v273, %v277
    %vm280 = vcmask 64512
    %v282 = vsel %vm280, %v154, 0
    %v285 = vsel %vm280, %v213, 0
    %287 = vmatprep.subr.bf16.mxu0 0
    %288 = vmatpush1.bf16.xpose.msra.mxu0 0
    %289 = vmatprep.subr.bf16.mxu0 0
    %290 = vmatpush1.bf16.xpose.msra.mxu0 0
    %291 = vmatprep.subr.bf16.mxu0 0
    %292 = vmatpush1.bf16.xpose.msra.mxu0 0
    %293 = vmatprep.subr.bf16.mxu0 0
    %294 = vmatpush1.bf16.xpose.msra.mxu0 0
    %295 = vmatprep.subr.bf16.mxu0 0
    %296 = vmatpush1.bf16.xpose.msra.mxu0 0
    %297 = vmatprep.subr.bf16.mxu0 0
    %298 = vmatpush1.bf16.xpose.msra.mxu0 0
    %299 = vmatprep.subr.bf16.mxu0 0
    %300 = vmatpush1.bf16.xpose.msra.mxu0 0
    %301 = vmatprep.subr.bf16.mxu0 0
    %302 = vmatpush1.bf16.xpose.msra.mxu0 %v285
    %303 = vmatprep.subr.bf16.mxu0 0
    %304 = vmatpush2.bf16.xpose.msra.mxu0 0
    %305 = vmatprep.subr.bf16.mxu0 0
    %306 = vmatpush2.bf16.xpose.msra.mxu0 0
    %307 = vmatprep.subr.bf16.mxu0 0
    %308 = vmatpush2.bf16.xpose.msra.mxu0 0
    %309 = vmatprep.subr.bf16.mxu0 0
    %310 = vmatpush2.bf16.xpose.msra.mxu0 0
    %311 = vmatprep.subr.bf16.mxu0 0
    %312 = vmatpush2.bf16.xpose.msra.mxu0 0
    %313 = vmatprep.subr.bf16.mxu0 0
    %314 = vmatpush2.bf16.xpose.msra.mxu0 0
    %315 = vmatprep.subr.bf16.mxu0 0
    %316 = vmatpush2.bf16.xpose.msra.mxu0 0
    %317 = vmatprep.subr.bf16.mxu0 0
    %318 = vmatpush2.bf16.xpose.msra.mxu0 0
    %319 = vmatprep.mubr.bf16.mxu0 0
    %320 = vmatmul.mubr.bf16.gmra.mxu0 %v282
    %v321 = vpop.f32.mrf.mxu0
    %v322 = vadd.f32 %v278, %v321
    %v323 = vpop.f32.mrf.mxu0
    %v324 = vpop.f32.mrf.mxu0
    %v325 = vpop.f32.mrf.mxu0
    %326 = vdwg.mxu0
    %v327 = vsel %vm280, %v322, -inf
    %328 = vmax.xlane.f32.xlu0 %v327
    %v329 = vpop.xlane.xlu0 %328
    %v330 = vsub.f32 %v322, %v329
    %v331 = vmul.f32 %v330, 1.442695
    %v332 = vpow.pop %v331
    %v333 = vsel %vm280, %v332, 0.0
    %334 = vadd.xlane.f32.xlu0 %v333
    %v335 = vpop.xlane.xlu0 %334
    %v336 = vrcp.pop %v335
    %v337 = vmul.f32 %v332, %v336
    %v338 = vpack.c.bf16 %v337, %v337
    %v340 = vsel %vm280, %v338, 0
    %vm342 = vcmask 1043456
    %v344 = vsel %vm342, %v272, 0
    %346 = vmatprep.subr.bf16.mxu0 0
    %347 = vmatpush1.bf16.msra.mxu0 0
    %348 = vmatprep.subr.bf16.mxu0 0
    %349 = vmatpush1.bf16.msra.mxu0 0
    %350 = vmatprep.subr.bf16.mxu0 0
    %351 = vmatpush1.bf16.msra.mxu0 0
    %352 = vmatprep.subr.bf16.mxu0 0
    %353 = vmatpush1.bf16.msra.mxu0 0
    %354 = vmatprep.subr.bf16.mxu0 0
    %355 = vmatpush1.bf16.msra.mxu0 0
    %356 = vmatprep.subr.bf16.mxu0 0
    %357 = vmatpush1.bf16.msra.mxu0 0
    %358 = vmatprep.subr.bf16.mxu0 0
    %359 = vmatpush1.bf16.msra.mxu0 0
    %360 = vmatprep.subr.bf16.mxu0 0
    %361 = vmatpush1.bf16.msra.mxu0 %v344
    %362 = vmatprep.subr.bf16.mxu0 0
    %363 = vmatpush2.bf16.msra.mxu0 0
    %364 = vmatprep.subr.bf16.mxu0 0
    %365 = vmatpush2.bf16.msra.mxu0 0
    %366 = vmatprep.subr.bf16.mxu0 0
    %367 = vmatpush2.bf16.msra.mxu0 0
    %368 = vmatprep.subr.bf16.mxu0 0
    %369 = vmatpush2.bf16.msra.mxu0 0
    %370 = vmatprep.subr.bf16.mxu0 0
    %371 = vmatpush2.bf16.msra.mxu0 0
    %372 = vmatprep.subr.bf16.mxu0 0
    %373 = vmatpush2.bf16.msra.mxu0 0
    %374 = vmatprep.subr.bf16.mxu0 0
    %375 = vmatpush2.bf16.msra.mxu0 0
    %376 = vmatprep.subr.bf16.mxu0 0
    %377 = vmatpush2.bf16.msra.mxu0 0
    %378 = vmatprep.mubr.bf16.mxu0 0
    %379 = vmatmul.mubr.bf16.gmra.mxu0 %v340
    %v380 = vpop.f32.mrf.mxu0
    %v381 = vadd.f32 0.0, %v380
    %v382 = vpop.f32.mrf.mxu0
    %v383 = vpop.f32.mrf.mxu0
    %v384 = vpop.f32.mrf.mxu0
    %385 = vdwg.mxu0
    %386 = vst.msk [vmem:[#allocation2] sm:$0xff] %vm280, %v381
    %388 = vrot.lane.b32.xlu0 %v154, 120
    %v389 = vpop.permute.xlu0 %388
    %391 = vrot.lane.b32.xlu0 %v213, 120
    %v392 = vpop.permute.xlu0 %391
    %v394 = vsel %vm280, %v389, 0
    %v397 = vsel %vm280, %v392, 0
    %399 = vmatprep.subr.bf16.mxu0 0
    %400 = vmatpush1.bf16.xpose.msra.mxu0 0
    %401 = vmatprep.subr.bf16.mxu0 0
    %402 = vmatpush1.bf16.xpose.msra.mxu0 0
    %403 = vmatprep.subr.bf16.mxu0 0
    %404 = vmatpush1.bf16.xpose.msra.mxu0 0
    %405 = vmatprep.subr.bf16.mxu0 0
    %406 = vmatpush1.bf16.xpose.msra.mxu0 0
    %407 = vmatprep.subr.bf16.mxu0 0
    %408 = vmatpush1.bf16.xpose.msra.mxu0 0
    %409 = vmatprep.subr.bf16.mxu0 0
    %410 = vmatpush1.bf16.xpose.msra.mxu0 0
    %411 = vmatprep.subr.bf16.mxu0 0
    %412 = vmatpush1.bf16.xpose.msra.mxu0 0
    %413 = vmatprep.subr.bf16.mxu0 0
    %414 = vmatpush1.bf16.xpose.msra.mxu0 %v397
    %415 = vmatprep.subr.bf16.mxu0 0
    %416 = vmatpush2.bf16.xpose.msra.mxu0 0
    %417 = vmatprep.subr.bf16.mxu0 0
    %418 = vmatpush2.bf16.xpose.msra.mxu0 0
    %419 = vmatprep.subr.bf16.mxu0 0
    %420 = vmatpush2.bf16.xpose.msra.mxu0 0
    %421 = vmatprep.subr.bf16.mxu0 0
    %422 = vmatpush2.bf16.xpose.msra.mxu0 0
    %423 = vmatprep.subr.bf16.mxu0 0
    %424 = vmatpush2.bf16.xpose.msra.mxu0 0
    %425 = vmatprep.subr.bf16.mxu0 0
    %426 = vmatpush2.bf16.xpose.msra.mxu0 0
    %427 = vmatprep.subr.bf16.mxu0 0
    %428 = vmatpush2.bf16.xpose.msra.mxu0 0
    %429 = vmatprep.subr.bf16.mxu0 0
    %430 = vmatpush2.bf16.xpose.msra.mxu0 0
    %431 = vmatprep.mubr.bf16.mxu0 0
    %432 = vmatmul.mubr.bf16.gmra.mxu0 %v394
    %v433 = vpop.f32.mrf.mxu0
    %v434 = vadd.f32 %v278, %v433
    %v435 = vpop.f32.mrf.mxu0
    %v436 = vpop.f32.mrf.mxu0
    %v437 = vpop.f32.mrf.mxu0
    %438 = vdwg.mxu0
    %v439 = vsel %vm280, %v434, -inf
    %440 = vmax.xlane.f32.xlu0 %v439
    %v441 = vpop.xlane.xlu0 %440
    %v442 = vsub.f32 %v434, %v441
    %v443 = vmul.f32 %v442, 1.442695
    %v444 = vpow.pop %v443
    %v445 = vsel %vm280, %v444, 0.0
    %446 = vadd.xlane.f32.xlu0 %v445
    %v447 = vpop.xlane.xlu0 %446
    %v448 = vrcp.pop %v447
    %v449 = vmul.f32 %v444, %v448
    %v450 = vpack.c.bf16 %v449, %v449
    %452 = vrot.lane.b32.xlu0 %v272, 120
    %v453 = vpop.permute.xlu0 %452
    %v455 = vsel %vm280, %v450, 0
    %v458 = vsel %vm342, %v453, 0
    %460 = vmatprep.subr.bf16.mxu0 0
    %461 = vmatpush1.bf16.msra.mxu0 0
    %462 = vmatprep.subr.bf16.mxu0 0
    %463 = vmatpush1.bf16.msra.mxu0 0
    %464 = vmatprep.subr.bf16.mxu0 0
    %465 = vmatpush1.bf16.msra.mxu0 0
    %466 = vmatprep.subr.bf16.mxu0 0
    %467 = vmatpush1.bf16.msra.mxu0 0
    %468 = vmatprep.subr.bf16.mxu0 0
    %469 = vmatpush1.bf16.msra.mxu0 0
    %470 = vmatprep.subr.bf16.mxu0 0
    %471 = vmatpush1.bf16.msra.mxu0 0
    %472 = vmatprep.subr.bf16.mxu0 0
    %473 = vmatpush1.bf16.msra.mxu0 0
    %474 = vmatprep.subr.bf16.mxu0 0
    %475 = vmatpush1.bf16.msra.mxu0 %v458
    %476 = vmatprep.subr.bf16.mxu0 0
    %477 = vmatpush2.bf16.msra.mxu0 0
    %478 = vmatprep.subr.bf16.mxu0 0
    %479 = vmatpush2.bf16.msra.mxu0 0
    %480 = vmatprep.subr.bf16.mxu0 0
    %481 = vmatpush2.bf16.msra.mxu0 0
    %482 = vmatprep.subr.bf16.mxu0 0
    %483 = vmatpush2.bf16.msra.mxu0 0
    %484 = vmatprep.subr.bf16.mxu0 0
    %485 = vmatpush2.bf16.msra.mxu0 0
    %486 = vmatprep.subr.bf16.mxu0 0
    %487 = vmatpush2.bf16.msra.mxu0 0
    %488 = vmatprep.subr.bf16.mxu0 0
    %489 = vmatpush2.bf16.msra.mxu0 0
    %490 = vmatprep.subr.bf16.mxu0 0
    %491 = vmatpush2.bf16.msra.mxu0 0
    %492 = vmatprep.mubr.bf16.mxu0 0
    %493 = vmatmul.mubr.bf16.gmra.mxu0 %v455
    %v494 = vpop.f32.mrf.mxu0
    %v495 = vadd.f32 0.0, %v494
    %v496 = vpop.f32.mrf.mxu0
    %v497 = vpop.f32.mrf.mxu0
    %v498 = vpop.f32.mrf.mxu0
    %499 = vdwg.mxu0
    %501 = vrot.lane.b32.xlu0 %v495, 8
    %v502 = vpop.permute.xlu0 %501
    %vm504 = vcmask 130112
    %505 = vst.msk [vmem:[#allocation2] sm:$0xff] %vm504, %v502
    %506 = vrot.lane.b32.xlu0 %v154, 112
    %v507 = vpop.permute.xlu0 %506
    %508 = vrot.lane.b32.xlu0 %v213, 112
    %v509 = vpop.permute.xlu0 %508
    %v511 = vsel %vm280, %v507, 0
    %v514 = vsel %vm280, %v509, 0
    %516 = vmatprep.subr.bf16.mxu0 0
    %517 = vmatpush1.bf16.xpose.msra.mxu0 0
    %518 = vmatprep.subr.bf16.mxu0 0
    %519 = vmatpush1.bf16.xpose.msra.mxu0 0
    %520 = vmatprep.subr.bf16.mxu0 0
    %521 = vmatpush1.bf16.xpose.msra.mxu0 0
    %522 = vmatprep.subr.bf16.mxu0 0
    %523 = vmatpush1.bf16.xpose.msra.mxu0 0
    %524 = vmatprep.subr.bf16.mxu0 0
    %525 = vmatpush1.bf16.xpose.msra.mxu0 0
    %526 = vmatprep.subr.bf16.mxu0 0
    %527 = vmatpush1.bf16.xpose.msra.mxu0 0
    %528 = vmatprep.subr.bf16.mxu0 0
    %529 = vmatpush1.bf16.xpose.msra.mxu0 0
    %530 = vmatprep.subr.bf16.mxu0 0
    %531 = vmatpush1.bf16.xpose.msra.mxu0 %v514
    %532 = vmatprep.subr.bf16.mxu0 0
    %533 = vmatpush2.bf16.xpose.msra.mxu0 0
    %534 = vmatprep.subr.bf16.mxu0 0
    %535 = vmatpush2.bf16.xpose.msra.mxu0 0
    %536 = vmatprep.subr.bf16.mxu0 0
    %537 = vmatpush2.bf16.xpose.msra.mxu0 0
    %538 = vmatprep.subr.bf16.mxu0 0
    %539 = vmatpush2.bf16.xpose.msra.mxu0 0
    %540 = vmatprep.subr.bf16.mxu0 0
    %541 = vmatpush2.bf16.xpose.msra.mxu0 0
    %542 = vmatprep.subr.bf16.mxu0 0
    %543 = vmatpush2.bf16.xpose.msra.mxu0 0
    %544 = vmatprep.subr.bf16.mxu0 0
    %545 = vmatpush2.bf16.xpose.msra.mxu0 0
    %546 = vmatprep.subr.bf16.mxu0 0
    %547 = vmatpush2.bf16.xpose.msra.mxu0 0
    %548 = vmatprep.mubr.bf16.mxu0 0
    %549 = vmatmul.mubr.bf16.gmra.mxu0 %v511
    %v550 = vpop.f32.mrf.mxu0
    %v551 = vadd.f32 %v278, %v550
    %v552 = vpop.f32.mrf.mxu0
    %v553 = vpop.f32.mrf.mxu0
    %v554 = vpop.f32.mrf.mxu0
    %555 = vdwg.mxu0
    %v556 = vsel %vm280, %v551, -inf
    %557 = vmax.xlane.f32.xlu0 %v556
    %v558 = vpop.xlane.xlu0 %557
    %v559 = vsub.f32 %v551, %v558
    %v560 = vmul.f32 %v559, 1.442695
    %v561 = vpow.pop %v560
    %v562 = vsel %vm280, %v561, 0.0
    %563 = vadd.xlane.f32.xlu0 %v562
    %v564 = vpop.xlane.xlu0 %563
    %v565 = vrcp.pop %v564
    %v566 = vmul.f32 %v561, %v565
    %v567 = vpack.c.bf16 %v566, %v566
    %568 = vrot.lane.b32.xlu0 %v272, 112
    %v569 = vpop.permute.xlu0 %568
    %v571 = vsel %vm280, %v567, 0
    %v574 = vsel %vm342, %v569, 0
    %576 = vmatprep.subr.bf16.mxu0 0
    %577 = vmatpush1.bf16.msra.mxu0 0
    %578 = vmatprep.subr.bf16.mxu0 0
    %579 = vmatpush1.bf16.msra.mxu0 0
    %580 = vmatprep.subr.bf16.mxu0 0
    %581 = vmatpush1.bf16.msra.mxu0 0
    %582 = vmatprep.subr.bf16.mxu0 0
    %583 = vmatpush1.bf16.msra.mxu0 0
    %584 = vmatprep.subr.bf16.mxu0 0
    %585 = vmatpush1.bf16.msra.mxu0 0
    %586 = vmatprep.subr.bf16.mxu0 0
    %587 = vmatpush1.bf16.msra.mxu0 0
    %588 = vmatprep.subr.bf16.mxu0 0
    %589 = vmatpush1.bf16.msra.mxu0 0
    %590 = vmatprep.subr.bf16.mxu0 0
    %591 = vmatpush1.bf16.msra.mxu0 %v574
    %592 = vmatprep.subr.bf16.mxu0 0
    %593 = vmatpush2.bf16.msra.mxu0 0
    %594 = vmatprep.subr.bf16.mxu0 0
    %595 = vmatpush2.bf16.msra.mxu0 0
    %596 = vmatprep.subr.bf16.mxu0 0
    %597 = vmatpush2.bf16.msra.mxu0 0
    %598 = vmatprep.subr.bf16.mxu0 0
    %599 = vmatpush2.bf16.msra.mxu0 0
    %600 = vmatprep.subr.bf16.mxu0 0
    %601 = vmatpush2.bf16.msra.mxu0 0
    %602 = vmatprep.subr.bf16.mxu0 0
    %603 = vmatpush2.bf16.msra.mxu0 0
    %604 = vmatprep.subr.bf16.mxu0 0
    %605 = vmatpush2.bf16.msra.mxu0 0
    %606 = vmatprep.subr.bf16.mxu0 0
    %607 = vmatpush2.bf16.msra.mxu0 0
    %608 = vmatprep.mubr.bf16.mxu0 0
    %609 = vmatmul.mubr.bf16.gmra.mxu0 %v571
    %v610 = vpop.f32.mrf.mxu0
    %v611 = vadd.f32 0.0, %v610
    %v612 = vpop.f32.mrf.mxu0
    %v613 = vpop.f32.mrf.mxu0
    %v614 = vpop.f32.mrf.mxu0
    %615 = vdwg.mxu0
    %617 = vrot.lane.b32.xlu0 %v611, 16
    %v618 = vpop.permute.xlu0 %617
    %vm620 = vcmask 195712
    %621 = vst.msk [vmem:[#allocation2] sm:$0xff] %vm620, %v618
    %622 = vrot.lane.b32.xlu0 %v154, 104
    %v623 = vpop.permute.xlu0 %622
    %624 = vrot.lane.b32.xlu0 %v213, 104
    %v625 = vpop.permute.xlu0 %624
    %v627 = vsel %vm280, %v623, 0
    %v630 = vsel %vm280, %v625, 0
    %632 = vmatprep.subr.bf16.mxu0 0
    %633 = vmatpush1.bf16.xpose.msra.mxu0 0
    %634 = vmatprep.subr.bf16.mxu0 0
    %635 = vmatpush1.bf16.xpose.msra.mxu0 0
    %636 = vmatprep.subr.bf16.mxu0 0
    %637 = vmatpush1.bf16.xpose.msra.mxu0 0
    %638 = vmatprep.subr.bf16.mxu0 0
    %639 = vmatpush1.bf16.xpose.msra.mxu0 0
    %640 = vmatprep.subr.bf16.mxu0 0
    %641 = vmatpush1.bf16.xpose.msra.mxu0 0
    %642 = vmatprep.subr.bf16.mxu0 0
    %643 = vmatpush1.bf16.xpose.msra.mxu0 0
    %644 = vmatprep.subr.bf16.mxu0 0
    %645 = vmatpush1.bf16.xpose.msra.mxu0 0
    %646 = vmatprep.subr.bf16.mxu0 0
    %647 = vmatpush1.bf16.xpose.msra.mxu0 %v630
    %648 = vmatprep.subr.bf16.mxu0 0
    %649 = vmatpush2.bf16.xpose.msra.mxu0 0
    %650 = vmatprep.subr.bf16.mxu0 0
    %651 = vmatpush2.bf16.xpose.msra.mxu0 0
    %652 = vmatprep.subr.bf16.mxu0 0
    %653 = vmatpush2.bf16.xpose.msra.mxu0 0
    %654 = vmatprep.subr.bf16.mxu0 0
    %655 = vmatpush2.bf16.xpose.msra.mxu0 0
    %656 = vmatprep.subr.bf16.mxu0 0
    %657 = vmatpush2.bf16.xpose.msra.mxu0 0
    %658 = vmatprep.subr.bf16.mxu0 0
    %659 = vmatpush2.bf16.xpose.msra.mxu0 0
    %660 = vmatprep.subr.bf16.mxu0 0
    %661 = vmatpush2.bf16.xpose.msra.mxu0 0
    %662 = vmatprep.subr.bf16.mxu0 0
    %663 = vmatpush2.bf16.xpose.msra.mxu0 0
    %664 = vmatprep.mubr.bf16.mxu0 0
    %665 = vmatmul.mubr.bf16.gmra.mxu0 %v627
    %v666 = vpop.f32.mrf.mxu0
    %v667 = vadd.f32 %v278, %v666
    %v668 = vpop.f32.mrf.mxu0
    %v669 = vpop.f32.mrf.mxu0
    %v670 = vpop.f32.mrf.mxu0
    %671 = vdwg.mxu0
    %v672 = vsel %vm280, %v667, -inf
    %673 = vmax.xlane.f32.xlu0 %v672
    %v674 = vpop.xlane.xlu0 %673
    %v675 = vsub.f32 %v667, %v674
    %v676 = vmul.f32 %v675, 1.442695
    %v677 = vpow.pop %v676
    %v678 = vsel %vm280, %v677, 0.0
    %679 = vadd.xlane.f32.xlu0 %v678
    %v680 = vpop.xlane.xlu0 %679
    %v681 = vrcp.pop %v680
    %v682 = vmul.f32 %v677, %v681
    %v683 = vpack.c.bf16 %v682, %v682
    %684 = vrot.lane.b32.xlu0 %v272, 104
    %v685 = vpop.permute.xlu0 %684
    %v687 = vsel %vm280, %v683, 0
    %v690 = vsel %vm342, %v685, 0
    %692 = vmatprep.subr.bf16.mxu0 0
    %693 = vmatpush1.bf16.msra.mxu0 0
    %694 = vmatprep.subr.bf16.mxu0 0
    %695 = vmatpush1.bf16.msra.mxu0 0
    %696 = vmatprep.subr.bf16.mxu0 0
    %697 = vmatpush1.bf16.msra.mxu0 0
    %698 = vmatprep.subr.bf16.mxu0 0
    %699 = vmatpush1.bf16.msra.mxu0 0
    %700 = vmatprep.subr.bf16.mxu0 0
    %701 = vmatpush1.bf16.msra.mxu0 0
    %702 = vmatprep.subr.bf16.mxu0 0
    %703 = vmatpush1.bf16.msra.mxu0 0
    %704 = vmatprep.subr.bf16.mxu0 0
    %705 = vmatpush1.bf16.msra.mxu0 0
    %706 = vmatprep.subr.bf16.mxu0 0
    %707 = vmatpush1.bf16.msra.mxu0 %v690
    %708 = vmatprep.subr.bf16.mxu0 0
    %709 = vmatpush2.bf16.msra.mxu0 0
    %710 = vmatprep.subr.bf16.mxu0 0
    %711 = vmatpush2.bf16.msra.mxu0 0
    %712 = vmatprep.subr.bf16.mxu0 0
    %713 = vmatpush2.bf16.msra.mxu0 0
    %714 = vmatprep.subr.bf16.mxu0 0
    %715 = vmatpush2.bf16.msra.mxu0 0
    %716 = vmatprep.subr.bf16.mxu0 0
    %717 = vmatpush2.bf16.msra.mxu0 0
    %718 = vmatprep.subr.bf16.mxu0 0
    %719 = vmatpush2.bf16.msra.mxu0 0
    %720 = vmatprep.subr.bf16.mxu0 0
    %721 = vmatpush2.bf16.msra.mxu0 0
    %722 = vmatprep.subr.bf16.mxu0 0
    %723 = vmatpush2.bf16.msra.mxu0 0
    %724 = vmatprep.mubr.bf16.mxu0 0
    %725 = vmatmul.mubr.bf16.gmra.mxu0 %v687
    %v726 = vpop.f32.mrf.mxu0
    %v727 = vadd.f32 0.0, %v726
    %v728 = vpop.f32.mrf.mxu0
    %v729 = vpop.f32.mrf.mxu0
    %v730 = vpop.f32.mrf.mxu0
    %731 = vdwg.mxu0
    %733 = vrot.lane.b32.xlu0 %v727, 24
    %v734 = vpop.permute.xlu0 %733
    %vm736 = vcmask 261312
    %737 = vst.msk [vmem:[#allocation2] sm:$0xff] %vm736, %v734
    %s738 = scalar_lea.vmem [#allocation6], 1
    %v739 = vld [vmem:[%s738] sm:$0x1]
    %v741 = vlaneseq
    %v742 = vshrl.u32 %v741, 7
    %v743 = vsub.s32 0, %v742
    %v744 = vrot.slane %v739, %v743
    %v746 = vrot.slane %v154, 4
    %v747 = vrot.slane %v213, 4
    %v749 = vsel %vm280, %v746, 0
    %v752 = vsel %vm280, %v747, 0
    %754 = vmatprep.subr.bf16.mxu0 0
    %755 = vmatpush1.bf16.xpose.msra.mxu0 0
    %756 = vmatprep.subr.bf16.mxu0 0
    %757 = vmatpush1.bf16.xpose.msra.mxu0 0
    %758 = vmatprep.subr.bf16.mxu0 0
    %759 = vmatpush1.bf16.xpose.msra.mxu0 0
    %760 = vmatprep.subr.bf16.mxu0 0
    %761 = vmatpush1.bf16.xpose.msra.mxu0 0
    %762 = vmatprep.subr.bf16.mxu0 0
    %763 = vmatpush1.bf16.xpose.msra.mxu0 0
    %764 = vmatprep.subr.bf16.mxu0 0
    %765 = vmatpush1.bf16.xpose.msra.mxu0 0
    %766 = vmatprep.subr.bf16.mxu0 0
    %767 = vmatpush1.bf16.xpose.msra.mxu0 0
    %768 = vmatprep.subr.bf16.mxu0 0
    %769 = vmatpush1.bf16.xpose.msra.mxu0 %v752
    %770 = vmatprep.subr.bf16.mxu0 0
    %771 = vmatpush2.bf16.xpose.msra.mxu0 0
    %772 = vmatprep.subr.bf16.mxu0 0
    %773 = vmatpush2.bf16.xpose.msra.mxu0 0
    %774 = vmatprep.subr.bf16.mxu0 0
    %775 = vmatpush2.bf16.xpose.msra.mxu0 0
    %776 = vmatprep.subr.bf16.mxu0 0
    %777 = vmatpush2.bf16.xpose.msra.mxu0 0
    %778 = vmatprep.subr.bf16.mxu0 0
    %779 = vmatpush2.bf16.xpose.msra.mxu0 0
    %780 = vmatprep.subr.bf16.mxu0 0
    %781 = vmatpush2.bf16.xpose.msra.mxu0 0
    %782 = vmatprep.subr.bf16.mxu0 0
    %783 = vmatpush2.bf16.xpose.msra.mxu0 0
    %784 = vmatprep.subr.bf16.mxu0 0
    %785 = vmatpush2.bf16.xpose.msra.mxu0 0
    %786 = vmatprep.mubr.bf16.mxu0 0
    %787 = vmatmul.mubr.bf16.gmra.mxu0 %v749
    %v788 = vpop.f32.mrf.mxu0
    %v789 = vadd.f32 %v744, %v788
    %v790 = vpop.f32.mrf.mxu0
    %v791 = vpop.f32.mrf.mxu0
    %v792 = vpop.f32.mrf.mxu0
    %793 = vdwg.mxu0
    %v794 = vsel %vm280, %v789, -inf
    %795 = vmax.xlane.f32.xlu0 %v794
    %v796 = vpop.xlane.xlu0 %795
    %v797 = vsub.f32 %v789, %v796
    %v798 = vmul.f32 %v797, 1.442695
    %v799 = vpow.pop %v798
    %v800 = vsel %vm280, %v799, 0.0
    %801 = vadd.xlane.f32.xlu0 %v800
    %v802 = vpop.xlane.xlu0 %801
    %v803 = vrcp.pop %v802
    %v804 = vmul.f32 %v799, %v803
    %v805 = vpack.c.bf16 %v804, %v804
    %v806 = vrot.slane %v272, 4
    %v808 = vsel %vm280, %v805, 0
    %v811 = vsel %vm342, %v806, 0
    %813 = vmatprep.subr.bf16.mxu0 0
    %814 = vmatpush1.bf16.msra.mxu0 0
    %815 = vmatprep.subr.bf16.mxu0 0
    %816 = vmatpush1.bf16.msra.mxu0 0
    %817 = vmatprep.subr.bf16.mxu0 0
    %818 = vmatpush1.bf16.msra.mxu0 0
    %819 = vmatprep.subr.bf16.mxu0 0
    %820 = vmatpush1.bf16.msra.mxu0 0
    %821 = vmatprep.subr.bf16.mxu0 0
    %822 = vmatpush1.bf16.msra.mxu0 0
    %823 = vmatprep.subr.bf16.mxu0 0
    %824 = vmatpush1.bf16.msra.mxu0 0
    %825 = vmatprep.subr.bf16.mxu0 0
    %826 = vmatpush1.bf16.msra.mxu0 0
    %827 = vmatprep.subr.bf16.mxu0 0
    %828 = vmatpush1.bf16.msra.mxu0 %v811
    %829 = vmatprep.subr.bf16.mxu0 0
    %830 = vmatpush2.bf16.msra.mxu0 0
    %831 = vmatprep.subr.bf16.mxu0 0
    %832 = vmatpush2.bf16.msra.mxu0 0
    %833 = vmatprep.subr.bf16.mxu0 0
    %834 = vmatpush2.bf16.msra.mxu0 0
    %835 = vmatprep.subr.bf16.mxu0 0
    %836 = vmatpush2.bf16.msra.mxu0 0
    %837 = vmatprep.subr.bf16.mxu0 0
    %838 = vmatpush2.bf16.msra.mxu0 0
    %839 = vmatprep.subr.bf16.mxu0 0
    %840 = vmatpush2.bf16.msra.mxu0 0
    %841 = vmatprep.subr.bf16.mxu0 0
    %842 = vmatpush2.bf16.msra.mxu0 0
    %843 = vmatprep.subr.bf16.mxu0 0
    %844 = vmatpush2.bf16.msra.mxu0 0
    %845 = vmatprep.mubr.bf16.mxu0 0
    %846 = vmatmul.mubr.bf16.gmra.mxu0 %v808
    %v847 = vpop.f32.mrf.mxu0
    %v848 = vadd.f32 0.0, %v847
    %v849 = vpop.f32.mrf.mxu0
    %v850 = vpop.f32.mrf.mxu0
    %v851 = vpop.f32.mrf.mxu0
    %852 = vdwg.mxu0
    %853 = vst.msk [vmem:[#allocation2 + $0x8] sm:$0xff] %vm280, %v848
    %854 = vrot.lane.b32.xlu0 %v746, 120
    %v855 = vpop.permute.xlu0 %854
    %856 = vrot.lane.b32.xlu0 %v747, 120
    %v857 = vpop.permute.xlu0 %856
    %v859 = vsel %vm280, %v855, 0
    %v862 = vsel %vm280, %v857, 0
    %864 = vmatprep.subr.bf16.mxu0 0
    %865 = vmatpush1.bf16.xpose.msra.mxu0 0
    %866 = vmatprep.subr.bf16.mxu0 0
    %867 = vmatpush1.bf16.xpose.msra.mxu0 0
    %868 = vmatprep.subr.bf16.mxu0 0
    %869 = vmatpush1.bf16.xpose.msra.mxu0 0
    %870 = vmatprep.subr.bf16.mxu0 0
    %871 = vmatpush1.bf16.xpose.msra.mxu0 0
    %872 = vmatprep.subr.bf16.mxu0 0
    %873 = vmatpush1.bf16.xpose.msra.mxu0 0
    %874 = vmatprep.subr.bf16.mxu0 0
    %875 = vmatpush1.bf16.xpose.msra.mxu0 0
    %876 = vmatprep.subr.bf16.mxu0 0
    %877 = vmatpush1.bf16.xpose.msra.mxu0 0
    %878 = vmatprep.subr.bf16.mxu0 0
    %879 = vmatpush1.bf16.xpose.msra.mxu0 %v862
    %880 = vmatprep.subr.bf16.mxu0 0
    %881 = vmatpush2.bf16.xpose.msra.mxu0 0
    %882 = vmatprep.subr.bf16.mxu0 0
    %883 = vmatpush2.bf16.xpose.msra.mxu0 0
    %884 = vmatprep.subr.bf16.mxu0 0
    %885 = vmatpush2.bf16.xpose.msra.mxu0 0
    %886 = vmatprep.subr.bf16.mxu0 0
    %887 = vmatpush2.bf16.xpose.msra.mxu0 0
    %888 = vmatprep.subr.bf16.mxu0 0
    %889 = vmatpush2.bf16.xpose.msra.mxu0 0
    %890 = vmatprep.subr.bf16.mxu0 0
    %891 = vmatpush2.bf16.xpose.msra.mxu0 0
    %892 = vmatprep.subr.bf16.mxu0 0
    %893 = vmatpush2.bf16.xpose.msra.mxu0 0
    %894 = vmatprep.subr.bf16.mxu0 0
    %895 = vmatpush2.bf16.xpose.msra.mxu0 0
    %896 = vmatprep.mubr.bf16.mxu0 0
    %897 = vmatmul.mubr.bf16.gmra.mxu0 %v859
    %v898 = vpop.f32.mrf.mxu0
    %v899 = vadd.f32 %v744, %v898
    %v900 = vpop.f32.mrf.mxu0
    %v901 = vpop.f32.mrf.mxu0
    %v902 = vpop.f32.mrf.mxu0
    %903 = vdwg.mxu0
    %v904 = vsel %vm280, %v899, -inf
    %905 = vmax.xlane.f32.xlu0 %v904
    %v906 = vpop.xlane.xlu0 %905
    %v907 = vsub.f32 %v899, %v906
    %v908 = vmul.f32 %v907, 1.442695
    %v909 = vpow.pop %v908
    %v910 = vsel %vm280, %v909, 0.0
    %911 = vadd.xlane.f32.xlu0 %v910
    %v912 = vpop.xlane.xlu0 %911
    %v913 = vrcp.pop %v912
    %v914 = vmul.f32 %v909, %v913
    %v915 = vpack.c.bf16 %v914, %v914
    %916 = vrot.lane.b32.xlu0 %v806, 120
    %v917 = vpop.permute.xlu0 %916
    %v919 = vsel %vm280, %v915, 0
    %v922 = vsel %vm342, %v917, 0
    %924 = vmatprep.subr.bf16.mxu0 0
    %925 = vmatpush1.bf16.msra.mxu0 0
    %926 = vmatprep.subr.bf16.mxu0 0
    %927 = vmatpush1.bf16.msra.mxu0 0
    %928 = vmatprep.subr.bf16.mxu0 0
    %929 = vmatpush1.bf16.msra.mxu0 0
    %930 = vmatprep.subr.bf16.mxu0 0
    %931 = vmatpush1.bf16.msra.mxu0 0
    %932 = vmatprep.subr.bf16.mxu0 0
    %933 = vmatpush1.bf16.msra.mxu0 0
    %934 = vmatprep.subr.bf16.mxu0 0
    %935 = vmatpush1.bf16.msra.mxu0 0
    %936 = vmatprep.subr.bf16.mxu0 0
    %937 = vmatpush1.bf16.msra.mxu0 0
    %938 = vmatprep.subr.bf16.mxu0 0
    %939 = vmatpush1.bf16.msra.mxu0 %v922
    %940 = vmatprep.subr.bf16.mxu0 0
    %941 = vmatpush2.bf16.msra.mxu0 0
    %942 = vmatprep.subr.bf16.mxu0 0
    %943 = vmatpush2.bf16.msra.mxu0 0
    %944 = vmatprep.subr.bf16.mxu0 0
    %945 = vmatpush2.bf16.msra.mxu0 0
    %946 = vmatprep.subr.bf16.mxu0 0
    %947 = vmatpush2.bf16.msra.mxu0 0
    %948 = vmatprep.subr.bf16.mxu0 0
    %949 = vmatpush2.bf16.msra.mxu0 0
    %950 = vmatprep.subr.bf16.mxu0 0
    %951 = vmatpush2.bf16.msra.mxu0 0
    %952 = vmatprep.subr.bf16.mxu0 0
    %953 = vmatpush2.bf16.msra.mxu0 0
    %954 = vmatprep.subr.bf16.mxu0 0
    %955 = vmatpush2.bf16.msra.mxu0 0
    %956 = vmatprep.mubr.bf16.mxu0 0
    %957 = vmatmul.mubr.bf16.gmra.mxu0 %v919
    %v958 = vpop.f32.mrf.mxu0
    %v959 = vadd.f32 0.0, %v958
    %v960 = vpop.f32.mrf.mxu0
    %v961 = vpop.f32.mrf.mxu0
    %v962 = vpop.f32.mrf.mxu0
    %963 = vdwg.mxu0
    %965 = vrot.lane.b32.xlu0 %v959, 8
    %v966 = vpop.permute.xlu0 %965
    %968 = vst.msk [vmem:[#allocation2 + $0x8] sm:$0xff] %vm504, %v966
    %969 = vrot.lane.b32.xlu0 %v746, 112
    %v970 = vpop.permute.xlu0 %969
    %971 = vrot.lane.b32.xlu0 %v747, 112
    %v972 = vpop.permute.xlu0 %971
    %v974 = vsel %vm280, %v970, 0
    %v977 = vsel %vm280, %v972, 0
    %979 = vmatprep.subr.bf16.mxu0 0
    %980 = vmatpush1.bf16.xpose.msra.mxu0 0
    %981 = vmatprep.subr.bf16.mxu0 0
    %982 = vmatpush1.bf16.xpose.msra.mxu0 0
    %983 = vmatprep.subr.bf16.mxu0 0
    %984 = vmatpush1.bf16.xpose.msra.mxu0 0
    %985 = vmatprep.subr.bf16.mxu0 0
    %986 = vmatpush1.bf16.xpose.msra.mxu0 0
    %987 = vmatprep.subr.bf16.mxu0 0
    %988 = vmatpush1.bf16.xpose.msra.mxu0 0
    %989 = vmatprep.subr.bf16.mxu0 0
    %990 = vmatpush1.bf16.xpose.msra.mxu0 0
    %991 = vmatprep.subr.bf16.mxu0 0
    %992 = vmatpush1.bf16.xpose.msra.mxu0 0
    %993 = vmatprep.subr.bf16.mxu0 0
    %994 = vmatpush1.bf16.xpose.msra.mxu0 %v977
    %995 = vmatprep.subr.bf16.mxu0 0
    %996 = vmatpush2.bf16.xpose.msra.mxu0 0
    %997 = vmatprep.subr.bf16.mxu0 0
    %998 = vmatpush2.bf16.xpose.msra.mxu0 0
    %999 = vmatprep.subr.bf16.mxu0 0
    %1000 = vmatpush2.bf16.xpose.msra.mxu0 0
    %1001 = vmatprep.subr.bf16.mxu0 0
    %1002 = vmatpush2.bf16.xpose.msra.mxu0 0
    %1003 = vmatprep.subr.bf16.mxu0 0
    %1004 = vmatpush2.bf16.xpose.msra.mxu0 0
    %1005 = vmatprep.subr.bf16.mxu0 0
    %1006 = vmatpush2.bf16.xpose.msra.mxu0 0
    %1007 = vmatprep.subr.bf16.mxu0 0
    %1008 = vmatpush2.bf16.xpose.msra.mxu0 0
    %1009 = vmatprep.subr.bf16.mxu0 0
    %1010 = vmatpush2.bf16.xpose.msra.mxu0 0
    %1011 = vmatprep.mubr.bf16.mxu0 0
    %1012 = vmatmul.mubr.bf16.gmra.mxu0 %v974
    %v1013 = vpop.f32.mrf.mxu0
    %v1014 = vadd.f32 %v744, %v1013
    %v1015 = vpop.f32.mrf.mxu0
    %v1016 = vpop.f32.mrf.mxu0
    %v1017 = vpop.f32.mrf.mxu0
    %1018 = vdwg.mxu0
    %v1019 = vsel %vm280, %v1014, -inf
    %1020 = vmax.xlane.f32.xlu0 %v1019
    %v1021 = vpop.xlane.xlu0 %1020
    %v1022 = vsub.f32 %v1014, %v1021
    %v1023 = vmul.f32 %v1022, 1.442695
    %v1024 = vpow.pop %v1023
    %v1025 = vsel %vm280, %v1024, 0.0
    %1026 = vadd.xlane.f32.xlu0 %v1025
    %v1027 = vpop.xlane.xlu0 %1026
    %v1028 = vrcp.pop %v1027
    %v1029 = vmul.f32 %v1024, %v1028
    %v1030 = vpack.c.bf16 %v1029, %v1029
    %1031 = vrot.lane.b32.xlu0 %v806, 112
    %v1032 = vpop.permute.xlu0 %1031
    %v1034 = vsel %vm280, %v1030, 0
    %v1037 = vsel %vm342, %v1032, 0
    %1039 = vmatprep.subr.bf16.mxu0 0
    %1040 = vmatpush1.bf16.msra.mxu0 0
    %1041 = vmatprep.subr.bf16.mxu0 0
    %1042 = vmatpush1.bf16.msra.mxu0 0
    %1043 = vmatprep.subr.bf16.mxu0 0
    %1044 = vmatpush1.bf16.msra.mxu0 0
    %1045 = vmatprep.subr.bf16.mxu0 0
    %1046 = vmatpush1.bf16.msra.mxu0 0
    %1047 = vmatprep.subr.bf16.mxu0 0
    %1048 = vmatpush1.bf16.msra.mxu0 0
    %1049 = vmatprep.subr.bf16.mxu0 0
    %1050 = vmatpush1.bf16.msra.mxu0 0
    %1051 = vmatprep.subr.bf16.mxu0 0
    %1052 = vmatpush1.bf16.msra.mxu0 0
    %1053 = vmatprep.subr.bf16.mxu0 0
    %1054 = vmatpush1.bf16.msra.mxu0 %v1037
    %1055 = vmatprep.subr.bf16.mxu0 0
    %1056 = vmatpush2.bf16.msra.mxu0 0
    %1057 = vmatprep.subr.bf16.mxu0 0
    %1058 = vmatpush2.bf16.msra.mxu0 0
    %1059 = vmatprep.subr.bf16.mxu0 0
    %1060 = vmatpush2.bf16.msra.mxu0 0
    %1061 = vmatprep.subr.bf16.mxu0 0
    %1062 = vmatpush2.bf16.msra.mxu0 0
    %1063 = vmatprep.subr.bf16.mxu0 0
    %1064 = vmatpush2.bf16.msra.mxu0 0
    %1065 = vmatprep.subr.bf16.mxu0 0
    %1066 = vmatpush2.bf16.msra.mxu0 0
    %1067 = vmatprep.subr.bf16.mxu0 0
    %1068 = vmatpush2.bf16.msra.mxu0 0
    %1069 = vmatprep.subr.bf16.mxu0 0
    %1070 = vmatpush2.bf16.msra.mxu0 0
    %1071 = vmatprep.mubr.bf16.mxu0 0
    %1072 = vmatmul.mubr.bf16.gmra.mxu0 %v1034
    %v1073 = vpop.f32.mrf.mxu0
    %v1074 = vadd.f32 0.0, %v1073
    %v1075 = vpop.f32.mrf.mxu0
    %v1076 = vpop.f32.mrf.mxu0
    %v1077 = vpop.f32.mrf.mxu0
    %1078 = vdwg.mxu0
    %1080 = vrot.lane.b32.xlu0 %v1074, 16
    %v1081 = vpop.permute.xlu0 %1080
    %1083 = vst.msk [vmem:[#allocation2 + $0x8] sm:$0xff] %vm620, %v1081
    %1084 = vrot.lane.b32.xlu0 %v746, 104
    %v1085 = vpop.permute.xlu0 %1084
    %1086 = vrot.lane.b32.xlu0 %v747, 104
    %v1087 = vpop.permute.xlu0 %1086
    %v1089 = vsel %vm280, %v1085, 0
    %v1092 = vsel %vm280, %v1087, 0
    %1094 = vmatprep.subr.bf16.mxu0 0
    %1095 = vmatpush1.bf16.xpose.msra.mxu0 0
    %1096 = vmatprep.subr.bf16.mxu0 0
    %1097 = vmatpush1.bf16.xpose.msra.mxu0 0
    %1098 = vmatprep.subr.bf16.mxu0 0
    %1099 = vmatpush1.bf16.xpose.msra.mxu0 0
    %1100 = vmatprep.subr.bf16.mxu0 0
    %1101 = vmatpush1.bf16.xpose.msra.mxu0 0
    %1102 = vmatprep.subr.bf16.mxu0 0
    %1103 = vmatpush1.bf16.xpose.msra.mxu0 0
    %1104 = vmatprep.subr.bf16.mxu0 0
    %1105 = vmatpush1.bf16.xpose.msra.mxu0 0
    %1106 = vmatprep.subr.bf16.mxu0 0
    %1107 = vmatpush1.bf16.xpose.msra.mxu0 0
    %1108 = vmatprep.subr.bf16.mxu0 0
    %1109 = vmatpush1.bf16.xpose.msra.mxu0 %v1092
    %1110 = vmatprep.subr.bf16.mxu0 0
    %1111 = vmatpush2.bf16.xpose.msra.mxu0 0
    %1112 = vmatprep.subr.bf16.mxu0 0
    %1113 = vmatpush2.bf16.xpose.msra.mxu0 0
    %1114 = vmatprep.subr.bf16.mxu0 0
    %1115 = vmatpush2.bf16.xpose.msra.mxu0 0
    %1116 = vmatprep.subr.bf16.mxu0 0
    %1117 = vmatpush2.bf16.xpose.msra.mxu0 0
    %1118 = vmatprep.subr.bf16.mxu0 0
    %1119 = vmatpush2.bf16.xpose.msra.mxu0 0
    %1120 = vmatprep.subr.bf16.mxu0 0
    %1121 = vmatpush2.bf16.xpose.msra.mxu0 0
    %1122 = vmatprep.subr.bf16.mxu0 0
    %1123 = vmatpush2.bf16.xpose.msra.mxu0 0
    %1124 = vmatprep.subr.bf16.mxu0 0
    %1125 = vmatpush2.bf16.xpose.msra.mxu0 0
    %1126 = vmatprep.mubr.bf16.mxu0 0
    %1127 = vmatmul.mubr.bf16.gmra.mxu0 %v1089
    %v1128 = vpop.f32.mrf.mxu0
    %v1129 = vadd.f32 %v744, %v1128
    %v1130 = vpop.f32.mrf.mxu0
    %v1131 = vpop.f32.mrf.mxu0
    %v1132 = vpop.f32.mrf.mxu0
    %1133 = vdwg.mxu0
    %v1134 = vsel %vm280, %v1129, -inf
    %1135 = vmax.xlane.f32.xlu0 %v1134
    %v1136 = vpop.xlane.xlu0 %1135
    %v1137 = vsub.f32 %v1129, %v1136
    %v1138 = vmul.f32 %v1137, 1.442695
    %v1139 = vpow.pop %v1138
    %v1140 = vsel %vm280, %v1139, 0.0
    %1141 = vadd.xlane.f32.xlu0 %v1140
    %v1142 = vpop.xlane.xlu0 %1141
    %v1143 = vrcp.pop %v1142
    %v1144 = vmul.f32 %v1139, %v1143
    %v1145 = vpack.c.bf16 %v1144, %v1144
    %1146 = vrot.lane.b32.xlu0 %v806, 104
    %v1147 = vpop.permute.xlu0 %1146
    %v1149 = vsel %vm280, %v1145, 0
    %v1152 = vsel %vm342, %v1147, 0
    %1154 = vmatprep.subr.bf16.mxu0 0
    %1155 = vmatpush1.bf16.msra.mxu0 0
    %1156 = vmatprep.subr.bf16.mxu0 0
    %1157 = vmatpush1.bf16.msra.mxu0 0
    %1158 = vmatprep.subr.bf16.mxu0 0
    %1159 = vmatpush1.bf16.msra.mxu0 0
    %1160 = vmatprep.subr.bf16.mxu0 0
    %1161 = vmatpush1.bf16.msra.mxu0 0
    %1162 = vmatprep.subr.bf16.mxu0 0
    %1163 = vmatpush1.bf16.msra.mxu0 0
    %1164 = vmatprep.subr.bf16.mxu0 0
    %1165 = vmatpush1.bf16.msra.mxu0 0
    %1166 = vmatprep.subr.bf16.mxu0 0
    %1167 = vmatpush1.bf16.msra.mxu0 0
    %1168 = vmatprep.subr.bf16.mxu0 0
    %1169 = vmatpush1.bf16.msra.mxu0 %v1152
    %1170 = vmatprep.subr.bf16.mxu0 0
    %1171 = vmatpush2.bf16.msra.mxu0 0
    %1172 = vmatprep.subr.bf16.mxu0 0
    %1173 = vmatpush2.bf16.msra.mxu0 0
    %1174 = vmatprep.subr.bf16.mxu0 0
    %1175 = vmatpush2.bf16.msra.mxu0 0
    %1176 = vmatprep.subr.bf16.mxu0 0
    %1177 = vmatpush2.bf16.msra.mxu0 0
    %1178 = vmatprep.subr.bf16.mxu0 0
    %1179 = vmatpush2.bf16.msra.mxu0 0
    %1180 = vmatprep.subr.bf16.mxu0 0
    %1181 = vmatpush2.bf16.msra.mxu0 0
    %1182 = vmatprep.subr.bf16.mxu0 0
    %1183 = vmatpush2.bf16.msra.mxu0 0
    %1184 = vmatprep.subr.bf16.mxu0 0
    %1185 = vmatpush2.bf16.msra.mxu0 0
    %1186 = vmatprep.mubr.bf16.mxu0 0
    %1187 = vmatmul.mubr.bf16.gmra.mxu0 %v1149
    %v1188 = vpop.f32.mrf.mxu0
    %v1189 = vadd.f32 0.0, %v1188
    %v1190 = vpop.f32.mrf.mxu0
    %v1191 = vpop.f32.mrf.mxu0
    %v1192 = vpop.f32.mrf.mxu0
    %1193 = vdwg.mxu0
    %1195 = vrot.lane.b32.xlu0 %v1189, 24
    %v1196 = vpop.permute.xlu0 %1195
    %1198 = vst.msk [vmem:[#allocation2 + $0x8] sm:$0xff] %vm736, %v1196
    %v1199 = vld [vmem:[#allocation2] sm:$0xff]
    %v1200 = vld [vmem:[#allocation2 + $0x8] sm:$0xff]
    %v1201 = vld [vmem:[%s6] sm:$0x3f]
    %v1202 = vpack.c.bf16 %v1200, %v1199
    %v1203 = vld [vmem:[#allocation8] sm:$0xf]
    %v1204 = vld [vmem:[#allocation8 + $0x4] sm:$0xf]
    %v1205 = vld [vmem:[#allocation8 + $0x8] sm:$0xf]
    %v1206 = vld [vmem:[#allocation8 + $0xc] sm:$0xf]
    %v1207 = vlaneseq
    %v1208 = vshrl.u32 %v1207, 7
    %v1209 = vsub.s32 0, %v1208
    %v1210 = vrot.slane %v1201, %v1209
    %v1215 = vunpack.c.l.b16 %v1203
    %v1216 = vunpack.c.l.b16 %v1204
    %v1217 = vunpack.c.l.b16 %v1205
    %v1218 = vunpack.c.l.b16 %v1206
    %v1219 = vpack.c.b16 %v1216, %v1215
    %v1220 = vpack.c.b16 %v1218, %v1217
    %v1224 = vsel %vm109, %v1202, 0
    %1226 = vmatprep.subr.bf16.mxu0 0
    %1227 = vmatpush1.bf16.msra.mxu0 0
    %1228 = vmatprep.subr.bf16.mxu0 0
    %1229 = vmatpush1.bf16.msra.mxu0 0
    %1230 = vmatprep.subr.bf16.mxu0 0
    %1231 = vmatpush1.bf16.msra.mxu0 0
    %1232 = vmatprep.subr.bf16.mxu0 0
    %1233 = vmatpush1.bf16.msra.mxu0 0
    %1234 = vmatprep.subr.bf16.mxu0 0
    %1235 = vmatpush1.bf16.msra.mxu0 0
    %1236 = vmatprep.subr.bf16.mxu0 0
    %1237 = vmatpush1.bf16.msra.mxu0 0
    %1238 = vmatprep.subr.bf16.mxu0 0
    %1239 = vmatpush1.bf16.msra.mxu0 %v1220
    %1240 = vmatprep.subr.bf16.mxu0 0
    %1241 = vmatpush1.bf16.msra.mxu0 %v1219
    %1242 = vmatprep.subr.bf16.mxu0 0
    %1243 = vmatpush2.bf16.msra.mxu0 0
    %1244 = vmatprep.subr.bf16.mxu0 0
    %1245 = vmatpush2.bf16.msra.mxu0 0
    %1246 = vmatprep.subr.bf16.mxu0 0
    %1247 = vmatpush2.bf16.msra.mxu0 0
    %1248 = vmatprep.subr.bf16.mxu0 0
    %1249 = vmatpush2.bf16.msra.mxu0 0
    %1250 = vmatprep.subr.bf16.mxu0 0
    %1251 = vmatpush2.bf16.msra.mxu0 0
    %1252 = vmatprep.subr.bf16.mxu0 0
    %1253 = vmatpush2.bf16.msra.mxu0 0
    %1254 = vmatprep.subr.bf16.mxu0 0
    %1255 = vmatpush2.bf16.msra.mxu0 0
    %1256 = vmatprep.subr.bf16.mxu0 0
    %1257 = vmatpush2.bf16.msra.mxu0 0
    %1258 = vmatprep.mubr.bf16.mxu0 0
    %1259 = vmatmul.mubr.bf16.gmra.mxu0 %v1224
    %v1260 = vpop.f32.mrf.mxu0
    %v1261 = vadd.f32 %v1210, %v1260
    %v1262 = vpop.f32.mrf.mxu0
    %v1263 = vpop.f32.mrf.mxu0
    %v1264 = vadd.f32 %v1210, %v1263
    %v1265 = vpop.f32.mrf.mxu0
    %1266 = vdwg.mxu0
    %v1267 = vunpack.c.l.bf16 %v86
    %v1268 = vunpack.c.l.bf16 %v87
    %v1269 = vadd.f32 %v1261, %v1267
    %v1270 = vadd.f32 %v1264, %v1268
    %v1271 = vsel %vm109, %v1269, 0.0
    %1272 = vadd.xlane.f32.xlu0 %v1271
    %v1273 = vpop.xlane.xlu0 %1272
    %v1274 = vsel %vm109, %v1270, 0.0
    %1275 = vadd.xlane.f32.xlu0 %v1274
    %v1276 = vpop.xlane.xlu0 %1275
    %v1277 = vrcp.pop 32.0
    %v1278 = vmul.f32 %v1273, %v1277
    %v1279 = vmul.f32 %v1276, %v1277
    %v1280 = vsub.f32 %v1269, %v1278
    %v1281 = vsub.f32 %v1270, %v1279
    %v1282 = vmul.f32 %v1280, %v1280
    %v1283 = vmul.f32 %v1281, %v1281
    %v1284 = vsel %vm109, %v1282, 0.0
    %1285 = vadd.xlane.f32.xlu0 %v1284
    %v1286 = vpop.xlane.xlu0 %1285
    %v1287 = vsel %vm109, %v1283, 0.0
    %1288 = vadd.xlane.f32.xlu0 %v1287
    %v1289 = vpop.xlane.xlu0 %1288
    %v1290 = vmul.f32 %v1286, %v1277
    %v1291 = vmul.f32 %v1289, %v1277
    %v1292 = vadd.f32 %v1290, 1e-05
    %v1293 = vadd.f32 %v1291, 1e-05
    %v1294 = vrsqrt.pop %v1292
    %v1295 = vrsqrt.pop %v1293
    %v1296 = vmul.f32 %v1280, %v1294
    %v1297 = vmul.f32 %v1281, %v1295
    %v1298 = vlaneseq
    %v1299 = vshrl.u32 %v1298, 7
    %v1300 = vsub.s32 1, %v1299
    %v1301 = vrot.slane %v1201, %v1300
    %v1302 = vmul.f32 %v1296, %v1301
    %v1303 = vmul.f32 %v1297, %v1301
    %v1304 = vlaneseq
    %v1305 = vshrl.u32 %v1304, 7
    %v1306 = vsub.s32 2, %v1305
    %v1307 = vrot.slane %v1201, %v1306
    %v1308 = vadd.f32 %v1302, %v1307
    %v1309 = vadd.f32 %v1303, %v1307
    %v1310 = vpack.c.bf16 %v1309, %v1308
    %v1311 = vld [vmem:[#allocation9] sm:$0xf]
    %v1312 = vld [vmem:[#allocation9 + $0x4] sm:$0xf]
    %v1313 = vld [vmem:[#allocation9 + $0x8] sm:$0xf]
    %v1314 = vld [vmem:[#allocation9 + $0xc] sm:$0xf]
    %v1315 = vld [vmem:[%s7] sm:$0x1]
    %v1317 = vlaneseq
    %v1318 = vshrl.u32 %v1317, 7
    %v1319 = vsub.s32 0, %v1318
    %v1320 = vrot.slane %v1315, %v1319
    %v1326 = vunpack.c.l.b16 %v1311
    %v1327 = vunpack.c.l.b16 %v1312
    %v1328 = vunpack.c.l.b16 %v1313
    %v1329 = vunpack.c.l.b16 %v1314
    %v1330 = vpack.c.b16 %v1327, %v1326
    %v1331 = vpack.c.b16 %v1329, %v1328
    %v1335 = vsel %vm109, %v1310, 0
    %1337 = vmatprep.subr.bf16.mxu0 0
    %1338 = vmatpush1.bf16.msra.mxu0 0
    %1339 = vmatprep.subr.bf16.mxu0 0
    %1340 = vmatpush1.bf16.msra.mxu0 0
    %1341 = vmatprep.subr.bf16.mxu0 0
    %1342 = vmatpush1.bf16.msra.mxu0 0
    %1343 = vmatprep.subr.bf16.mxu0 0
    %1344 = vmatpush1.bf16.msra.mxu0 0
    %1345 = vmatprep.subr.bf16.mxu0 0
    %1346 = vmatpush1.bf16.msra.mxu0 0
    %1347 = vmatprep.subr.bf16.mxu0 0
    %1348 = vmatpush1.bf16.msra.mxu0 0
    %1349 = vmatprep.subr.bf16.mxu0 0
    %1350 = vmatpush1.bf16.msra.mxu0 %v1331
    %1351 = vmatprep.subr.bf16.mxu0 0
    %1352 = vmatpush1.bf16.msra.mxu0 %v1330
    %1353 = vmatprep.subr.bf16.mxu0 0
    %1354 = vmatpush2.bf16.msra.mxu0 0
    %1355 = vmatprep.subr.bf16.mxu0 0
    %1356 = vmatpush2.bf16.msra.mxu0 0
    %1357 = vmatprep.subr.bf16.mxu0 0
    %1358 = vmatpush2.bf16.msra.mxu0 0
    %1359 = vmatprep.subr.bf16.mxu0 0
    %1360 = vmatpush2.bf16.msra.mxu0 0
    %1361 = vmatprep.subr.bf16.mxu0 0
    %1362 = vmatpush2.bf16.msra.mxu0 0
    %1363 = vmatprep.subr.bf16.mxu0 0
    %1364 = vmatpush2.bf16.msra.mxu0 0
    %1365 = vmatprep.subr.bf16.mxu0 0
    %1366 = vmatpush2.bf16.msra.mxu0 0
    %1367 = vmatprep.subr.bf16.mxu0 0
    %1368 = vmatpush2.bf16.msra.mxu0 0
    %1369 = vmatprep.mubr.bf16.mxu0 0
    %1370 = vmatmul.mubr.bf16.gmra.mxu0 %v1335
    %v1371 = vpop.f32.mrf.mxu0
    %v1372 = vadd.f32 %v1320, %v1371
    %v1373 = vpop.f32.mrf.mxu0
    %v1374 = vpop.f32.mrf.mxu0
    %v1375 = vadd.f32 %v1320, %v1374
    %v1376 = vpop.f32.mrf.mxu0
    %1377 = vdwg.mxu0
    %v1378 = vmax.f32 %v1372, 0.0
    %v1379 = vmax.f32 %v1375, 0.0
    %v1380 = vpack.c.bf16 %v1379, %v1378
    %v1381 = vld [vmem:[%s5] sm:$0xf]
    %v1382 = vld [vmem:[%s5 + $0x4] sm:$0xf]
    %v1383 = vld [vmem:[%s5 + $0x8] sm:$0xf]
    %v1384 = vld [vmem:[%s5 + $0xc] sm:$0xf]
    %v1385 = vld [vmem:[%s5 + $0x10] sm:$0xf]
    %v1386 = vld [vmem:[%s5 + $0x14] sm:$0xf]
    %v1387 = vld [vmem:[%s5 + $0x18] sm:$0xf]
    %v1388 = vld [vmem:[%s5 + $0x1c] sm:$0xf]
    %v1389 = vlaneseq
    %v1390 = vshrl.u32 %v1389, 7
    %v1391 = vsub.s32 3, %v1390
    %v1392 = vrot.slane %v1201, %v1391
    %v1401 = vunpack.c.l.b16 %v1381
    %v1402 = vunpack.c.l.b16 %v1382
    %v1403 = vunpack.c.l.b16 %v1383
    %v1404 = vunpack.c.l.b16 %v1384
    %v1405 = vunpack.c.l.b16 %v1385
    %v1406 = vunpack.c.l.b16 %v1386
    %v1407 = vunpack.c.l.b16 %v1387
    %v1408 = vunpack.c.l.b16 %v1388
    %v1409 = vpack.c.b16 %v1402, %v1401
    %v1410 = vpack.c.b16 %v1404, %v1403
    %v1411 = vpack.c.b16 %v1406, %v1405
    %v1412 = vpack.c.b16 %v1408, %v1407
    %vm1417 = vcmask 523264
    %v1419 = vsel %vm1417, %v1380, 0
    %1421 = vmatprep.subr.bf16.mxu0 0
    %1422 = vmatpush1.bf16.msra.mxu0 0
    %1423 = vmatprep.subr.bf16.mxu0 0
    %1424 = vmatpush1.bf16.msra.mxu0 0
    %1425 = vmatprep.subr.bf16.mxu0 0
    %1426 = vmatpush1.bf16.msra.mxu0 0
    %1427 = vmatprep.subr.bf16.mxu0 0
    %1428 = vmatpush1.bf16.msra.mxu0 0
    %1429 = vmatprep.subr.bf16.mxu0 0
    %1430 = vmatpush1.bf16.msra.mxu0 %v1412
    %1431 = vmatprep.subr.bf16.mxu0 0
    %1432 = vmatpush1.bf16.msra.mxu0 %v1411
    %1433 = vmatprep.subr.bf16.mxu0 0
    %1434 = vmatpush1.bf16.msra.mxu0 %v1410
    %1435 = vmatprep.subr.bf16.mxu0 0
    %1436 = vmatpush1.bf16.msra.mxu0 %v1409
    %1437 = vmatprep.subr.bf16.mxu0 0
    %1438 = vmatpush2.bf16.msra.mxu0 0
    %1439 = vmatprep.subr.bf16.mxu0 0
    %1440 = vmatpush2.bf16.msra.mxu0 0
    %1441 = vmatprep.subr.bf16.mxu0 0
    %1442 = vmatpush2.bf16.msra.mxu0 0
    %1443 = vmatprep.subr.bf16.mxu0 0
    %1444 = vmatpush2.bf16.msra.mxu0 0
    %1445 = vmatprep.subr.bf16.mxu0 0
    %1446 = vmatpush2.bf16.msra.mxu0 0
    %1447 = vmatprep.subr.bf16.mxu0 0
    %1448 = vmatpush2.bf16.msra.mxu0 0
    %1449 = vmatprep.subr.bf16.mxu0 0
    %1450 = vmatpush2.bf16.msra.mxu0 0
    %1451 = vmatprep.subr.bf16.mxu0 0
    %1452 = vmatpush2.bf16.msra.mxu0 0
    %1453 = vmatprep.mubr.bf16.mxu0 0
    %1454 = vmatmul.mubr.bf16.gmra.mxu0 %v1419
    %v1455 = vpop.f32.mrf.mxu0
    %v1456 = vadd.f32 %v1392, %v1455
    %v1457 = vpop.f32.mrf.mxu0
    %v1458 = vpop.f32.mrf.mxu0
    %v1459 = vadd.f32 %v1392, %v1458
    %v1460 = vpop.f32.mrf.mxu0
    %1461 = vdwg.mxu0
    %v1462 = vadd.f32 %v1456, %v1308
    %v1463 = vadd.f32 %v1459, %v1309
    %v1464 = vsel %vm109, %v1462, 0.0
    %1465 = vadd.xlane.f32.xlu0 %v1464
    %v1466 = vpop.xlane.xlu0 %1465
    %v1467 = vsel %vm109, %v1463, 0.0
    %1468 = vadd.xlane.f32.xlu0 %v1467
    %v1469 = vpop.xlane.xlu0 %1468
    %v1470 = vmul.f32 %v1466, %v1277
    %v1471 = vmul.f32 %v1469, %v1277
    %v1472 = vsub.f32 %v1462, %v1470
    %v1473 = vsub.f32 %v1463, %v1471
    %v1474 = vmul.f32 %v1472, %v1472
    %v1475 = vmul.f32 %v1473, %v1473
    %v1476 = vsel %vm109, %v1474, 0.0
    %1477 = vadd.xlane.f32.xlu0 %v1476
    %v1478 = vpop.xlane.xlu0 %1477
    %v1479 = vsel %vm109, %v1475, 0.0
    %1480 = vadd.xlane.f32.xlu0 %v1479
    %v1481 = vpop.xlane.xlu0 %1480
    %v1482 = vmul.f32 %v1478, %v1277
    %v1483 = vmul.f32 %v1481, %v1277
    %v1484 = vadd.f32 %v1482, 1e-05
    %v1485 = vadd.f32 %v1483, 1e-05
    %v1486 = vrsqrt.pop %v1484
    %v1487 = vrsqrt.pop %v1485
    %v1488 = vmul.f32 %v1472, %v1486
    %v1489 = vmul.f32 %v1473, %v1487
    %v1490 = vlaneseq
    %v1491 = vshrl.u32 %v1490, 7
    %v1492 = vsub.s32 4, %v1491
    %v1493 = vrot.slane %v1201, %v1492
    %v1494 = vmul.f32 %v1488, %v1493
    %v1495 = vmul.f32 %v1489, %v1493
    %v1496 = vlaneseq
    %v1497 = vshrl.u32 %v1496, 7
    %v1498 = vsub.s32 5, %v1497
    %v1499 = vrot.slane %v1201, %v1498
    %v1500 = vadd.f32 %v1494, %v1499
    %v1501 = vadd.f32 %v1495, %v1499
    %v1502 = vpack.c.bf16 %v1501, %v1500
    %v1504 = vunpack.c.l.b16 %v1502
    %v1505 = vunpack.c.h.b16 %v1502
    %v1506 = vpack.c.b16 %v1504, %v1504
    %v1507 = vpack.c.b16 %v1505, %v1505
    %vm1510 = vcmask 257024
    %1511 = vst.msk [vmem:[#allocation11] sm:$0xf] %vm1510, %v1506
    %1512 = vst.msk [vmem:[#allocation11 + $0x4] sm:$0xf] %vm1510, %v1507
    // Predicated region
    $region50: #{tpu_custom_call.1} parent=1 // pred_check
      _
    $region51: #{tpu_custom_call.1} parent=1 // pred_check_branch
      %1514 = sbr.rel (0) target = $region53
    $region52: #{tpu_custom_call.1} parent=1 // pred_region
      %s1516 = ssub.s32 128, 128
      %1517 = vsyncadd [#allocation5], %s1516
      %s1518 = sshll.u32 [#allocation11], 4
      %s1519 = int_to_ptr.vmem [resolvable:$true] %s1518
      %1524 = dma.vmem_to_hbm [thread:$0]  %s1519, 128, %s8, [#allocation5], 64, 64, 4
    $region53: #{tpu_custom_call.1} parent=1 // pred_fallthru
      _
    // Predicated region
    $region54: #{tpu_custom_call.1} parent=1 // pred_check
      _
    $region55: #{tpu_custom_call.1} parent=1 // pred_check_branch
      %1526 = sbr.rel (0) target = $region57
    $region56: #{tpu_custom_call.1} parent=1 // pred_region
      %1527 = dma.done [#allocation5], 128
    $region57: #{tpu_custom_call.1} parent=1 // pred_fallthru
      _
    %1528 = vsyncpa [#allocation4], 1
    %1529 = vsyncpa [#allocation7], 1
    %1530 = vsyncpa [#allocation10], 1
    %1531 = vsyncpa [#allocation5], 1

</llo_original>
